<compile_context>
chip_gen: v6e
topology: v6e:2x2x1
jax: 0.10.0
libtpu: 0.0.40
codegen_flags: <defaults>
</compile_context>

<pallas_src>
import jax
import jax.numpy as jnp
import numpy as np
from jax.experimental import pallas as pl
from jax.experimental.pallas import tpu as pltpu

NEG_SLOPE = 0.01  # nn.LeakyReLU default


def _leaky(x):
    # 0 < NEG_SLOPE < 1  =>  leaky_relu(x) == max(x, NEG_SLOPE * x)  (mul+max)
    return jnp.maximum(x, NEG_SLOPE * x)


# ------------------------- parameter-slab layout ---------------------------- #
SLAB_ROWS = 96
SLAB_SHAPE = (SLAB_ROWS, 128)
R_ACONV = 0    # rows  0:48, cols 0:8  : stacked [a_even^T ; a_odd^T]      (48, 8)
R_WEO = 48     # rows 48:56, cols 0:24 : e_out Linear weight               (8, 24)
R_MT = 56      # rows 56:80, cols 0:8  : dconv scatter^T, zero-padded row  (24, 8)
R_W4 = 80      # rows 80:88, cols 0:24 : fc4 weight in row 80, rest zero   (8, 24)
C_WIN = 64     # rows  0:8             : input Linear weight (per feature)
C_BIN = 65     # rows  0:8             : input Linear bias
C_BC = 66      # rows  0:24            : conv bias per flattened (c,pp) column
C_BEO = 67     # rows  0:8             : e_out bias
C_BD = 68      # rows  0:24            : dconv bias (scalar replicated)
C_B4 = 69      # rows  0:8             : fc4 bias in row 0, rest zero


# ----------------------------- Pallas kernel -------------------------------- #
def cae_single_kernel(x_ref, w_ref, out_ref):
    x = x_ref[...]                                            # (1, TB) batch-on-lanes

    # input: Linear(1, 8) + LeakyReLU                          -> (8, TB)
    w_in = w_ref[0:8, C_WIN:C_WIN + 1]                        # (8, 1)
    b_in = w_ref[0:8, C_BIN:C_BIN + 1]                        # (8, 1)
    h0 = _leaky(w_in * x + b_in)

    # Conv1d(1,8,3) + MaxPool1d(2) + LeakyReLU: one stacked even/odd scatter
    # matmul, then elementwise max over the two pooling taps   -> (24, TB)
    a_conv = w_ref[R_ACONV:R_ACONV + 48, 0:8]                 # (48, 8)
    conv = jnp.dot(a_conv, h0, preferred_element_type=jnp.float32)   # (48, TB)
    b_c = w_ref[0:24, C_BC:C_BC + 1]                          # (24, 1)
    pooled = _leaky(jnp.maximum(conv[:24], conv[24:]) + b_c)

    # e_out: Linear(24, 8) + ELU                               -> (8, TB)
    w_eo = w_ref[R_WEO:R_WEO + 8, 0:24]                       # (8, 24)
    b_eo = w_ref[0:8, C_BEO:C_BEO + 1]                        # (8, 1)
    e = jnp.dot(w_eo, pooled, preferred_element_type=jnp.float32) + b_eo
    # ELU without a select: exp(min(e,0)) is exactly 1.0 for e > 0.
    en = jnp.maximum(e, 0.0) + (jnp.exp(jnp.minimum(e, 0.0)) - 1.0)

    # decode: ConvTranspose1d(1,1,3,s=3,p=1,op=1) as scatter matmul + ReLU
    # (row 23 of the scatter matrix is zero padding; it is killed below by the
    #  zero fc4-weight entry, so it never affects the result)  -> (24, TB)
    m_t = w_ref[R_MT:R_MT + 24, 0:8]                          # (24, 8)
    b_d = w_ref[0:24, C_BD:C_BD + 1]                          # (24, 1)
    d = jnp.maximum(jnp.dot(m_t, en, preferred_element_type=jnp.float32) + b_d,
                    0.0)

    # fc4: Linear(23, 1) as a (8,24) matmul whose row 0 is the fc4 weight and
    # rows 1:8 are zero -> result is an 8-row dense slab with xhat in row 0.
    w4 = w_ref[R_W4:R_W4 + 8, 0:24]                           # (8, 24)
    b4 = w_ref[0:8, C_B4:C_B4 + 1]                            # (8, 1), row 0 = bias
    xhat8 = jnp.dot(w4, d, preferred_element_type=jnp.float32) + b4

    # Single lane+sublane-dense output block: rows 0:8 en, row 8 x_hat, 9:16 zero.
    out_ref[0:8, :] = en.astype(out_ref.dtype)
    out_ref[8:16, :] = xhat8.astype(out_ref.dtype)


# ------------------------------- wrapper ------------------------------------ #
def _round_up(v, m):
    return ((v + m - 1) // m) * m


def _choose_batch_tile(B, tb):
    """Pick the lane-tile width.  Default cap 16384 is safe for the 16 MiB v5e
    scoped-VMEM default; keep >= 2 grid steps when possible so the 'parallel'
    axis can shard across v7x's two TensorCores.  Pass tb explicitly (with
    vmem_limit_bytes) to go larger on v6e (up to ~65536) / v7x (~32768)."""
    B128 = _round_up(max(int(B), 1), 128)
    if tb is None:
        cap = 16384
        n_tiles = max(pl.cdiv(B128, cap), 2 if B128 >= 256 else 1)
        tb = _round_up(pl.cdiv(B128, n_tiles), 128)
    tb = int(tb)
    if tb % 128 != 0:
        raise ValueError("batch tile must be a multiple of 128 (lane-aligned)")
    n_tiles = pl.cdiv(B128, tb)
    return tb, n_tiles, n_tiles * tb


def cae_single_forward(x, slab, *, tb=None, out_dtype=jnp.float32,
                       transpose_outputs=True, vmem_limit_bytes=None):
    """x: (B, 1) or (B,) float32.

    transpose_outputs=True  -> (en (B, 8), x_hat (B, 1))   [PyTorch semantics]
    transpose_outputs=False -> (en (8, B), x_hat (1, B))   [feature-major; no
                                extra XLA transpose pass over the en stream]
    """
    x = jnp.asarray(x, jnp.float32)
    B = int(x.shape[0])
    tb_, n_tiles, Bp = _choose_batch_tile(B, tb)

    xT = x.reshape(1, B)                                      # batch -> lane axis
    if Bp != B:
        xT = jnp.pad(xT, ((0, 0), (0, Bp - B)))               # zero-pad, slice later

    cp_kwargs = dict(dimension_semantics=("parallel",))       # v7x: shard over TCs
    if vmem_limit_bytes is not None:
        cp_kwargs["vmem_limit_bytes"] = int(vmem_limit_bytes)

    out = pl.pallas_call(
        cae_single_kernel,
        out_shape=jax.ShapeDtypeStruct((16, Bp), out_dtype),  # rows 0:8 en, row 8 xhat
        grid_spec=pltpu.PrefetchScalarGridSpec(
            num_scalar_prefetch=0,
            grid=(n_tiles,),
            in_specs=[
                pl.BlockSpec((1, tb_), lambda i: (0, i)),      # x tile (lane-dense)
                pl.BlockSpec(SLAB_SHAPE, lambda i: (0, 0)),    # params, fetched once
            ],
            out_specs=pl.BlockSpec((16, tb_), lambda i: (0, i)),
        ),
        compiler_params=pltpu.CompilerParams(**cp_kwargs),
    )(xT, slab)

    if Bp != B:
        out = out[:, :B]
    if transpose_outputs:
        return out[0:8].T, out[8:9].T                          # (B, 8), (B, 1)
    return out[0:8], out[8:9]                                  # (8, B), (1, B)


# --------------------- deterministic parameter setup ------------------------ #
def init_params(key):
    ks = jax.random.split(key, 10)

    def u(k, shape, fan_in):
        bound = 1.0 / np.sqrt(fan_in)
        return jax.random.uniform(k, shape, jnp.float32, -bound, bound)

    return dict(
        w_input=u(ks[0], (8, 1), 1),        # nn.Linear(1, 8)
        b_input=u(ks[1], (8,), 1),
        w_conv1=u(ks[2], (8, 1, 3), 3),     # nn.Conv1d(1, 8, 3)
        b_conv1=u(ks[3], (8,), 3),
        w_eout=u(ks[4], (8, 24), 24),       # nn.Linear(24, 8)
        b_eout=u(ks[5], (8,), 24),
        w_dconv=u(ks[6], (1, 1, 3), 3),     # nn.ConvTranspose1d(1, 1, 3, s=3, p=1, op=1)
        b_dconv=u(ks[7], (1,), 3),
        w_fc4=u(ks[8], (1, 23), 23),        # nn.Linear(23, 1)
        b_fc4=u(ks[9], (1,), 23),
    )


def pack_params(p):
    """Fold all conv / linear weights + biases into one (96, 128) f32 slab."""
    wc = np.asarray(p["w_conv1"])[:, 0, :]                    # (8, 3)
    cols = np.arange(24)
    c_idx = cols // 3                                         # output channel
    pp_idx = cols % 3                                         # pooled position

    # Conv1d(1,8,3): conv[b,c,t] = sum_k h0[b, t+k] * wc[c, k].  Even matrix
    # hits t = 2*pp, odd matrix t = 2*pp + 1 (MaxPool1d(2) taps).
    def build_a(t):                                           # -> (8, 24)
        k = np.arange(8)[:, None] - t[None, :]
        valid = (k >= 0) & (k < 3)
        kc = np.clip(k, 0, 2)
        vals = wc[c_idx[None, :], kc]
        return np.where(valid, vals, 0.0).astype(np.float32)

    a_even = build_a(2 * pp_idx)
    a_odd = build_a(2 * pp_idx + 1)

    # ConvTranspose1d(1,1,3,stride=3,padding=1,output_padding=1):
    # out[b, p] = z[b, (p+1)//3] * wd[(p+1)%3] + bias  (each p hits one tap)
    wd = np.asarray(p["w_dconv"])[0, 0, :]                    # (3,)
    pos = np.arange(23)
    i_idx = (pos + 1) // 3
    k_idx = (pos + 1) % 3
    m = np.zeros((8, 23), np.float32)
    m[i_idx, pos] = wd[k_idx]

    slab = np.zeros(SLAB_SHAPE, np.float32)
    slab[R_ACONV:R_ACONV + 24, 0:8] = a_even.T                # (24, 8)
    slab[R_ACONV + 24:R_ACONV + 48, 0:8] = a_odd.T            # (24, 8)
    slab[R_WEO:R_WEO + 8, 0:24] = np.asarray(p["w_eout"])     # (8, 24)
    slab[R_MT:R_MT + 23, 0:8] = m.T                           # (23, 8); row 23 stays 0
    slab[R_W4, 0:23] = np.asarray(p["w_fc4"])[0, :]           # col 23 / rows 81:88 stay 0
    slab[0:8, C_WIN] = np.asarray(p["w_input"])[:, 0]
    slab[0:8, C_BIN] = np.asarray(p["b_input"])
    slab[0:24, C_BC] = np.repeat(np.asarray(p["b_conv1"]), 3)
    slab[0:8, C_BEO] = np.asarray(p["b_eout"])
    slab[0:24, C_BD] = float(np.asarray(p["b_dconv"])[0])
    slab[0, C_B4] = float(np.asarray(p["b_fc4"])[0])
    return jnp.asarray(slab)


# ------------------------ pure-JAX reference model --------------------------- #
def ref_forward(x, p):
    B = x.shape[0]
    h0 = _leaky(x * p["w_input"][:, 0][None, :] + p["b_input"][None, :])  # (B, 8)

    conv = jnp.zeros((B, 8, 6), jnp.float32)
    for k in range(3):
        conv = conv + h0[:, None, k:k + 6] * p["w_conv1"][:, 0, k][None, :, None]
    conv = conv + p["b_conv1"][None, :, None]
    pooled = _leaky(jnp.max(conv.reshape(B, 8, 3, 2), axis=-1))           # (B, 8, 3)
    flat = pooled.reshape(B, 24)

    e = flat @ p["w_eout"].T + p["b_eout"][None, :]
    en = jnp.where(e > 0, e, jnp.exp(jnp.minimum(e, 0.0)) - 1.0)          # (B, 8)

    full = jnp.zeros((B, 24), jnp.float32)
    for i in range(8):
        for k in range(3):
            full = full.at[:, i * 3 + k].add(en[:, i] * p["w_dconv"][0, 0, k])
    d = jnp.maximum(full[:, 1:24] + p["b_dconv"][0], 0.0)                 # (B, 23)
    xhat = d @ p["w_fc4"].T + p["b_fc4"][None, :]                         # (B, 1)
    return en, xhat


if __name__ == "__main__":
    key = jax.random.PRNGKey(0)
    pkey, xkey = jax.random.split(key)
    params_raw = init_params(pkey)
    slab = pack_params(params_raw)

    # B=2048: tile-multiple fast path (no pad/slice), 2 grid steps (auto tb=1024)
    #         so the "parallel" axis can use both v7x TensorCores.
    # B=333 : ragged path, exercises zero-pad + slice.
    for B in (2048, 333):
        x = jax.random.normal(jax.random.fold_in(xkey, B), (B, 1), jnp.float32)
        en, xhat = cae_single_forward(x, slab)
        jax.block_until_ready((en, xhat))

        en_ref, xhat_ref = ref_forward(x, params_raw)
        np.testing.assert_allclose(np.asarray(en), np.asarray(en_ref),
                                   rtol=1e-4, atol=1e-4)
        np.testing.assert_allclose(np.asarray(xhat), np.asarray(xhat_ref),
                                   rtol=1e-4, atol=1e-4)

    print("KERNEL_OK")
</pallas_src>

<mosaic_0001>
module attributes {stable_mosaic.version = 11 : i64} {
  func.func @cae_single_kernel(%arg0: i32, %arg1: memref<1x1024xf32, #tpu.memory_space<vmem>>, %arg2: memref<96x128xf32, #tpu.memory_space<vmem>>, %arg3: memref<16x1024xf32, #tpu.memory_space<vmem>>) attributes {dimension_semantics = [#tpu.dimension_semantics<parallel>], iteration_bounds = array<i64: 2>, scalar_prefetch = 0 : i64, scratch_operands = 0 : i64, tpu.core_type = #tpu.core_type<tc>, window_params = [{transform_indices = @transform_0, window_bounds = array<i64: 1, 1024>}, {pipeline_mode = #tpu.pipeline_mode<synchronous>, transform_indices = @transform_1, window_bounds = array<i64: 96, 128>}, {transform_indices = @transform_2, window_bounds = array<i64: 16, 1024>}]} {
    %c0 = arith.constant 0 : index
    %c0_0 = arith.constant 0 : index
    %0 = vector.load %arg1[%c0, %c0_0] : memref<1x1024xf32, #tpu.memory_space<vmem>>, vector<1x1024xf32>
    %c0_1 = arith.constant 0 : index
    %c64 = arith.constant 64 : index
    %1 = vector.load %arg2[%c0_1, %c64] : memref<96x128xf32, #tpu.memory_space<vmem>>, vector<8x1xf32>
    %c0_2 = arith.constant 0 : index
    %c65 = arith.constant 65 : index
    %2 = vector.load %arg2[%c0_2, %c65] : memref<96x128xf32, #tpu.memory_space<vmem>>, vector<8x1xf32>
    %3 = vector.broadcast %1 : vector<8x1xf32> to vector<8x1024xf32>
    %4 = vector.broadcast %0 : vector<1x1024xf32> to vector<8x1024xf32>
    %5 = arith.mulf %3, %4 : vector<8x1024xf32>
    %6 = vector.broadcast %2 : vector<8x1xf32> to vector<8x1024xf32>
    %7 = arith.addf %5, %6 : vector<8x1024xf32>
    %cst = arith.constant 0.00999999977 : f32
    %8 = vector.broadcast %cst : f32 to vector<8x1024xf32>
    %9 = arith.mulf %8, %7 : vector<8x1024xf32>
    %10 = arith.maximumf %7, %9 : vector<8x1024xf32>
    %c0_3 = arith.constant 0 : index
    %c0_4 = arith.constant 0 : index
    %11 = vector.load %arg2[%c0_3, %c0_4] : memref<96x128xf32, #tpu.memory_space<vmem>>, vector<48x8xf32>
    %cst_5 = arith.constant dense<0.000000e+00> : vector<48x1024xf32>
    %12 = tpu.matmul %11, %10, %cst_5 {dimension_numbers = #tpu.dot_dimension_numbers<[1], [0], [0], [1], [0, 0, 1, 1], [], []>} : vector<48x8xf32>, vector<8x1024xf32>, vector<48x1024xf32> -> vector<48x1024xf32>
    %c0_6 = arith.constant 0 : index
    %c66 = arith.constant 66 : index
    %13 = vector.load %arg2[%c0_6, %c66] : memref<96x128xf32, #tpu.memory_space<vmem>>, vector<24x1xf32>
    %14 = vector.extract_strided_slice %12 {offsets = [0, 0], sizes = [24, 1024], strides = [1, 1]} : vector<48x1024xf32> to vector<24x1024xf32>
    %15 = vector.extract_strided_slice %12 {offsets = [24, 0], sizes = [24, 1024], strides = [1, 1]} : vector<48x1024xf32> to vector<24x1024xf32>
    %16 = arith.maximumf %14, %15 : vector<24x1024xf32>
    %17 = vector.broadcast %13 : vector<24x1xf32> to vector<24x1024xf32>
    %18 = arith.addf %16, %17 : vector<24x1024xf32>
    %cst_7 = arith.constant 0.00999999977 : f32
    %19 = vector.broadcast %cst_7 : f32 to vector<24x1024xf32>
    %20 = arith.mulf %19, %18 : vector<24x1024xf32>
    %21 = arith.maximumf %18, %20 : vector<24x1024xf32>
    %c48 = arith.constant 48 : index
    %c0_8 = arith.constant 0 : index
    %22 = vector.load %arg2[%c48, %c0_8] : memref<96x128xf32, #tpu.memory_space<vmem>>, vector<8x24xf32>
    %c0_9 = arith.constant 0 : index
    %c67 = arith.constant 67 : index
    %23 = vector.load %arg2[%c0_9, %c67] : memref<96x128xf32, #tpu.memory_space<vmem>>, vector<8x1xf32>
    %cst_10 = arith.constant dense<0.000000e+00> : vector<8x1024xf32>
    %24 = tpu.matmul %22, %21, %cst_10 {dimension_numbers = #tpu.dot_dimension_numbers<[1], [0], [0], [1], [0, 0, 1, 1], [], []>} : vector<8x24xf32>, vector<24x1024xf32>, vector<8x1024xf32> -> vector<8x1024xf32>
    %25 = vector.broadcast %23 : vector<8x1xf32> to vector<8x1024xf32>
    %26 = arith.addf %24, %25 : vector<8x1024xf32>
    %cst_11 = arith.constant 0.000000e+00 : f32
    %27 = vector.broadcast %cst_11 : f32 to vector<8x1024xf32>
    %28 = arith.maximumf %26, %27 : vector<8x1024xf32>
    %cst_12 = arith.constant 0.000000e+00 : f32
    %29 = vector.broadcast %cst_12 : f32 to vector<8x1024xf32>
    %30 = arith.minimumf %26, %29 : vector<8x1024xf32>
    %31 = math.exp %30 : vector<8x1024xf32>
    %cst_13 = arith.constant 1.000000e+00 : f32
    %32 = vector.broadcast %cst_13 : f32 to vector<8x1024xf32>
    %33 = arith.subf %31, %32 : vector<8x1024xf32>
    %34 = arith.addf %28, %33 : vector<8x1024xf32>
    %c56 = arith.constant 56 : index
    %c0_14 = arith.constant 0 : index
    %35 = vector.load %arg2[%c56, %c0_14] : memref<96x128xf32, #tpu.memory_space<vmem>>, vector<24x8xf32>
    %c0_15 = arith.constant 0 : index
    %c68 = arith.constant 68 : index
    %36 = vector.load %arg2[%c0_15, %c68] : memref<96x128xf32, #tpu.memory_space<vmem>>, vector<24x1xf32>
    %cst_16 = arith.constant dense<0.000000e+00> : vector<24x1024xf32>
    %37 = tpu.matmul %35, %34, %cst_16 {dimension_numbers = #tpu.dot_dimension_numbers<[1], [0], [0], [1], [0, 0, 1, 1], [], []>} : vector<24x8xf32>, vector<8x1024xf32>, vector<24x1024xf32> -> vector<24x1024xf32>
    %38 = vector.broadcast %36 : vector<24x1xf32> to vector<24x1024xf32>
    %39 = arith.addf %37, %38 : vector<24x1024xf32>
    %cst_17 = arith.constant 0.000000e+00 : f32
    %40 = vector.broadcast %cst_17 : f32 to vector<24x1024xf32>
    %41 = arith.maximumf %39, %40 : vector<24x1024xf32>
    %c80 = arith.constant 80 : index
    %c0_18 = arith.constant 0 : index
    %42 = vector.load %arg2[%c80, %c0_18] : memref<96x128xf32, #tpu.memory_space<vmem>>, vector<8x24xf32>
    %c0_19 = arith.constant 0 : index
    %c69 = arith.constant 69 : index
    %43 = vector.load %arg2[%c0_19, %c69] : memref<96x128xf32, #tpu.memory_space<vmem>>, vector<8x1xf32>
    %cst_20 = arith.constant dense<0.000000e+00> : vector<8x1024xf32>
    %44 = tpu.matmul %42, %41, %cst_20 {dimension_numbers = #tpu.dot_dimension_numbers<[1], [0], [0], [1], [0, 0, 1, 1], [], []>} : vector<8x24xf32>, vector<24x1024xf32>, vector<8x1024xf32> -> vector<8x1024xf32>
    %45 = vector.broadcast %43 : vector<8x1xf32> to vector<8x1024xf32>
    %46 = arith.addf %44, %45 : vector<8x1024xf32>
    %c0_21 = arith.constant 0 : index
    %c0_22 = arith.constant 0 : index
    %47 = vector.load %arg3[%c0_21, %c0_22] : memref<16x1024xf32, #tpu.memory_space<vmem>>, vector<8x1024xf32>
    tpu.vector_store %arg3[%c0_21, %c0_22], %34 {strides = array<i32>} : memref<16x1024xf32, #tpu.memory_space<vmem>>, vector<8x1024xf32>,
    %c8 = arith.constant 8 : index
    %c0_23 = arith.constant 0 : index
    %48 = vector.load %arg3[%c8, %c0_23] : memref<16x1024xf32, #tpu.memory_space<vmem>>, vector<8x1024xf32>
    tpu.vector_store %arg3[%c8, %c0_23], %46 {strides = array<i32>} : memref<16x1024xf32, #tpu.memory_space<vmem>>, vector<8x1024xf32>,
    return
  }
  func.func @transform_0(%arg0: i32) -> (i32, i32) {
    %c0_i32 = arith.constant 0 : i32
    %c0_i32_0 = arith.constant 0 : i32
    return %c0_i32, %arg0 : i32, i32
  }
  func.func @transform_1(%arg0: i32) -> (i32, i32) {
    %c0_i32 = arith.constant 0 : i32
    %c0_i32_0 = arith.constant 0 : i32
    %c0_i32_1 = arith.constant 0 : i32
    return %c0_i32, %c0_i32_0 : i32, i32
  }
  func.func @transform_2(%arg0: i32) -> (i32, i32) {
    %c0_i32 = arith.constant 0 : i32
    %c0_i32_0 = arith.constant 0 : i32
    return %c0_i32, %arg0 : i32, i32
  }
}

</mosaic_0001>

<llo_original>
// kernel: tpu_custom_call.1
$region0: #{tpu_custom_call.1}
  #allocation0 [shape = 'u32[]', space=smem, size = 0x4, offset = 0x4, fixed_abs, tag = 'smem constant byte address 0x4 - core index']
  #allocation1 [shape = 'u32[144,128]{1,0:T(1,128)}', space=vmem, size = 0x12000, scoped, tag = 'internal scratch']
  %s0 = inlined_call_operand.hbm [shape: f32[1,2048], index: 0, kind: input, shape index: {}]
  %s1 = inlined_call_operand.hbm [shape: f32[96,128], index: 1, kind: input, shape index: {}]
  %s2 = inlined_call_operand.hbm [shape: f32[16,2048], index: 2, kind: output, shape index: {}]
  %s3 = sld [smem:[#allocation0]]
  $region49: #{tpu_custom_call.1} parent=0
    _
  %s5 = ssub.s32 1, %s3
  %s6 = scalar_select 0, %s5, %s3
  $region1: #{tpu_custom_call.1} parent=0
    #allocation2 [shape = 'u8[8192]{0}', space=vmem, size = 0x2000, scoped, tag = 'input window, operand 0']
    #allocation3 [shape = 's32[2]{0}', space=sflag, size = 0x8, scoped, tag = 'scoped memory for tpu_custom_call.1']
    #allocation4 [shape = 's32[2]{0}', space=sflag, size = 0x8, scoped, tag = 'scoped memory for tpu_custom_call.1']
    #allocation5 [shape = 'u8[49152]{0}', space=vmem, size = 0xc000, scoped, tag = 'input window, operand 1, single buffered']
    #allocation6 [shape = 's32[1]{0}', space=sflag, size = 0x4, scoped, tag = 'scoped memory for tpu_custom_call.1']
    #allocation7 [shape = 'u8[131072]{0}', space=vmem, size = 0x20000, scoped, tag = 'output window, operand 0']
    %7 = vsyncpa [#allocation3], 0
    %s8 = scalar_lea.sflag [#allocation3], 1
    %9 = vsyncpa %s8, 0
    %10 = vsyncpa [#allocation6], 0
    %11 = vsyncpa [#allocation4], 0
    %s12 = scalar_lea.sflag [#allocation4], 1
    %13 = vsyncpa %s12, 0
    loop: start=0, step=1, limit=4
    $region2: #{tpu_custom_call.1} parent=1 // loop_pre_header
      _
    $region3: #{tpu_custom_call.1} parent=1 // loop_header
      %s15 = sphi 0, %s19
      %p16 = scmp.ge.s32.totalorder %s15, 4
      %s25 = sphi 0, %s27
      %s28 = sphi 0, %s25
      %s29 = sphi 0, %s28
      %s45 = sphi 0, %s29
      %s49 = sphi 0, %s49
      %s51 = sphi 0, %s49
      %s52 = sphi 0, %s51
      %s66 = sphi 0, %s52
      %s72 = sphi 0, %s74
      %s75 = sphi 0, %s72
      %s76 = sphi 0, %s75
      %s92 = sphi 0, %s76
    $region4: #{tpu_custom_call.1} parent=1 // loop_header_branch
      %18 = sbr.rel (%p16) target = $region8
    $region5: #{tpu_custom_call.1} parent=1 // loop_body
      %s20 = ssub.s32 %s15, 1
      %s21 = ssub.s32 %s15, 2
      %s22 = sadd.s32 %s15, 1
      %s23 = ssub.s32 %s15, %s22
      %p24 = scmp.eq.s32.totalorder %s23, 0
      %s26 = sadd.s32 %s25, 1
      %s27 = scalar_select %p24, %s25, %s26
      %p30 = pneg %p24
      %p31 = scmp.eq.s32.totalorder %s15, 1
      %p32 = por %p30, %p31
      %p33 = scmp.ne.s32.totalorder %s25, %s28
      %p34 = scmp.eq.s32.totalorder %s15, 0
      %p35 = por %p33, %p34
      %p36 = scmp.ne.s32.totalorder %s25, %s28
      %p37 = scmp.eq.s32.totalorder %s20, 1
      %p38 = por %p36, %p37
      %p39 = scmp.ne.s32.totalorder %s28, %s29
      %p40 = scmp.eq.s32.totalorder %s20, 0
      %p41 = por %p39, %p40
      %p42 = scmp.ne.s32.totalorder %s28, %s29
      %p43 = scmp.eq.s32.totalorder %s21, 1
      %p44 = por %p42, %p43
      %p46 = scmp.ne.s32.totalorder %s29, %s45
      %p47 = scmp.eq.s32.totalorder %s21, 0
      %p48 = por %p46, %p47
      %s50 = sadd.s32 %s49, 1
      %p53 = scmp.eq.s32.totalorder %s15, 1
      %p54 = scmp.ne.s32.totalorder %s49, %s51
      %p55 = scmp.eq.s32.totalorder %s15, 0
      %p56 = por %p54, %p55
      %p57 = scmp.ne.s32.totalorder %s49, %s51
      %p58 = scmp.eq.s32.totalorder %s20, 1
      %p59 = por %p57, %p58
      %p60 = scmp.ne.s32.totalorder %s51, %s52
      %p61 = scmp.eq.s32.totalorder %s20, 0
      %p62 = por %p60, %p61
      %p63 = scmp.ne.s32.totalorder %s51, %s52
      %p64 = scmp.eq.s32.totalorder %s21, 1
      %p65 = por %p63, %p64
      %p67 = scmp.ne.s32.totalorder %s52, %s66
      %p68 = scmp.eq.s32.totalorder %s21, 0
      %p69 = por %p67, %p68
      %s70 = ssub.s32 %s15, %s22
      %p71 = scmp.eq.s32.totalorder %s70, 0
      %s73 = sadd.s32 %s72, 1
      %s74 = scalar_select %p71, %s72, %s73
      %p77 = pneg %p71
      %p78 = scmp.eq.s32.totalorder %s15, 1
      %p79 = por %p77, %p78
      %p80 = scmp.ne.s32.totalorder %s72, %s75
      %p81 = scmp.eq.s32.totalorder %s15, 0
      %p82 = por %p80, %p81
      %p83 = scmp.ne.s32.totalorder %s72, %s75
      %p84 = scmp.eq.s32.totalorder %s20, 1
      %p85 = por %p83, %p84
      %p86 = scmp.ne.s32.totalorder %s75, %s76
      %p87 = scmp.eq.s32.totalorder %s20, 0
      %p88 = por %p86, %p87
      %p89 = scmp.ne.s32.totalorder %s75, %s76
      %p90 = scmp.eq.s32.totalorder %s21, 1
      %p91 = por %p89, %p90
      %p93 = scmp.ne.s32.totalorder %s76, %s92
      %p94 = scmp.eq.s32.totalorder %s21, 0
      %p95 = por %p93, %p94
      %p96 = scmp.le.s32.totalorder 1, %s15
      %p97 = scmp.lt.s32.totalorder %s15, 3
      %p98 = pnand %p96, %p97
      %p99 = pneg %p98
      // Predicated region
      $region9: #{tpu_custom_call.1} parent=5 // pred_check
        _
      $region10: #{tpu_custom_call.1} parent=5 // pred_check_branch
        %101 = sbr.rel (%p98) target = $region12
      $region11: #{tpu_custom_call.1} parent=5 // pred_region
        %s102 = ssub.s32 %s15, 1
        // Predicated region
        $region13: #{tpu_custom_call.1} parent=11 // pred_check
          %p103 = pneg %p62
        $region14: #{tpu_custom_call.1} parent=11 // pred_check_branch
          %105 = sbr.rel (%p103) target = $region16
        $region15: #{tpu_custom_call.1} parent=11 // pred_region
          %s107 = ssub.s32 1536, 1536
          %108 = vsyncadd [#allocation6], %s107
          %s109 = sshll.u32 [#allocation5], 4
          %s110 = int_to_ptr.vmem [resolvable:$true] %s109
          %115 = dma.hbm_to_vmem [thread:$0]  %s1, 1536, %s110, [#allocation6], 128, 128, 8
        $region16: #{tpu_custom_call.1} parent=11 // pred_fallthru
          _
      $region12: #{tpu_custom_call.1} parent=5 // pred_fallthru
        _
      %p116 = scmp.lt.s32.totalorder %s15, 2
      // Predicated region
      $region17: #{tpu_custom_call.1} parent=5 // pred_check
        %p117 = pneg %p116
      $region18: #{tpu_custom_call.1} parent=5 // pred_check_branch
        %119 = sbr.rel (%p117) target = $region20
      $region19: #{tpu_custom_call.1} parent=5 // pred_region
        // Predicated region
        $region21: #{tpu_custom_call.1} parent=19 // pred_check
          %p120 = pneg %p35
        $region22: #{tpu_custom_call.1} parent=19 // pred_check_branch
          %122 = sbr.rel (%p120) target = $region24
        $region23: #{tpu_custom_call.1} parent=19 // pred_region
          %s123 = sand.u32 %s25, 1
          %s124 = scalar_lea.sflag [#allocation3], %s123
          %s125 = sand.u32 %s25, 1
          %s126 = smul.addr %s125, 8
          %s127 = scalar_lea.vmem [#allocation2], %s126
          %s128 = smul.u32 8, %s15
          %s130 = ssub.s32 128, 128
          %131 = vsyncadd %s124, %s130
          %s132 = smul.addr %s128, 16
          %s133 = scalar_lea.hbm %s0, %s132
          %s135 = sshll.u32 %s127, 4
          %s136 = int_to_ptr.vmem [resolvable:$true] %s135
          %138 = dma.hbm_to_vmem [thread:$0]  %s133, 128, %s136, %s124
        $region24: #{tpu_custom_call.1} parent=19 // pred_fallthru
          _
      $region20: #{tpu_custom_call.1} parent=5 // pred_fallthru
        _
      %p139 = scmp.le.s32.totalorder 1, %s15
      %p140 = scmp.lt.s32.totalorder %s15, 3
      %p141 = pnand %p139, %p140
      %p142 = pneg %p141
      // Predicated region
      $region25: #{tpu_custom_call.1} parent=5 // pred_check
        _
      $region26: #{tpu_custom_call.1} parent=5 // pred_check_branch
        %144 = sbr.rel (%p141) target = $region28
      $region27: #{tpu_custom_call.1} parent=5 // pred_region
        %s145 = ssub.s32 %s15, 1
        %s146 = sand.u32 %s28, 1
        %s147 = scalar_lea.sflag [#allocation3], %s146
        %s148 = sand.u32 %s28, 1
        %s149 = smul.addr %s148, 8
        %s150 = scalar_lea.vmem [#allocation2], %s149
        // Predicated region
        $region29: #{tpu_custom_call.1} parent=27 // pred_check
          %p151 = pneg %p41
        $region30: #{tpu_custom_call.1} parent=27 // pred_check_branch
          %153 = sbr.rel (%p151) target = $region32
        $region31: #{tpu_custom_call.1} parent=27 // pred_region
          %154 = dma.done %s147, 128
        $region32: #{tpu_custom_call.1} parent=27 // pred_fallthru
          _
        // Predicated region
        $region33: #{tpu_custom_call.1} parent=27 // pred_check
          %p155 = pneg %p62
        $region34: #{tpu_custom_call.1} parent=27 // pred_check_branch
          %157 = sbr.rel (%p155) target = $region36
        $region35: #{tpu_custom_call.1} parent=27 // pred_region
          %158 = dma.done [#allocation6], 1536
        $region36: #{tpu_custom_call.1} parent=27 // pred_fallthru
          _
        %s159 = sand.u32 %s28, 1
        %s160 = scalar_lea.sflag [#allocation3], %s159
        %s161 = sand.u32 %s28, 1
        %s162 = smul.addr %s161, 8
        %s163 = scalar_lea.vmem [#allocation2], %s162
        %p164 = pneg %p41
        %p165 = pneg %p38
        %p166 = pneg %p62
        %p167 = pneg %p59
        %p168 = pneg %p88
        %p169 = pneg %p85
        %s170 = sand.u32 %s75, 1
        %s171 = scalar_lea.sflag [#allocation4], %s170
        %s172 = sand.u32 %s75, 1
        %s173 = smul.addr %s172, 128
        %s174 = scalar_lea.vmem [#allocation7], %s173
        %s175 = smul.u32 8, %s20
        %s176 = smul.u32 8, %s20
        %v177 = vld [vmem:[%s150] sm:$0xff]
        %v178 = vld [vmem:[#allocation5] sm:$0xff]
        %180 = vset.pattern.permute.xlu0 64
        %181 = vperm.xlu0 %180, %v178
        %v182 = vpop.permute.xlu0 %181
        %v185 = vlaneseq
        %v186 = vshrl.u32 %v185, 7
        %v187 = vsub.s32 0, %v186
        %v188 = vrot.slane %v177, %v187
        %v189 = vlaneseq
        %v190 = vshrl.u32 %v189, 7
        %v191 = vsub.s32 1, %v190
        %v192 = vrot.slane %v177, %v191
        %v193 = vlaneseq
        %v194 = vshrl.u32 %v193, 7
        %v195 = vsub.s32 2, %v194
        %v196 = vrot.slane %v177, %v195
        %v197 = vlaneseq
        %v198 = vshrl.u32 %v197, 7
        %v199 = vsub.s32 3, %v198
        %v200 = vrot.slane %v177, %v199
        %v201 = vlaneseq
        %v202 = vshrl.u32 %v201, 7
        %v203 = vsub.s32 4, %v202
        %v204 = vrot.slane %v177, %v203
        %v205 = vlaneseq
        %v206 = vshrl.u32 %v205, 7
        %v207 = vsub.s32 5, %v206
        %v208 = vrot.slane %v177, %v207
        %v209 = vlaneseq
        %v210 = vshrl.u32 %v209, 7
        %v211 = vsub.s32 6, %v210
        %v212 = vrot.slane %v177, %v211
        %v213 = vlaneseq
        %v214 = vshrl.u32 %v213, 7
        %v215 = vsub.s32 7, %v214
        %v216 = vrot.slane %v177, %v215
        %v225 = vmul.f32 %v182, %v188
        %v226 = vmul.f32 %v182, %v192
        %v227 = vmul.f32 %v182, %v196
        %v228 = vmul.f32 %v182, %v200
        %v229 = vmul.f32 %v182, %v204
        %v230 = vmul.f32 %v182, %v208
        %v231 = vmul.f32 %v182, %v212
        %v232 = vmul.f32 %v182, %v216
        %233 = vset.pattern.permute.xlu0 65
        %234 = vperm.xlu0 %233, %v178
        %v235 = vpop.permute.xlu0 %234
        %v237 = vadd.f32 %v225, %v235
        %v238 = vadd.f32 %v226, %v235
        %v239 = vadd.f32 %v227, %v235
        %v240 = vadd.f32 %v228, %v235
        %v241 = vadd.f32 %v229, %v235
        %v242 = vadd.f32 %v230, %v235
        %v243 = vadd.f32 %v231, %v235
        %v244 = vadd.f32 %v232, %v235
        %v245 = vmul.f32 %v237, 0.01
        %v246 = vmul.f32 %v238, 0.01
        %v247 = vmul.f32 %v239, 0.01
        %v248 = vmul.f32 %v240, 0.01
        %v249 = vmul.f32 %v241, 0.01
        %v250 = vmul.f32 %v242, 0.01
        %v251 = vmul.f32 %v243, 0.01
        %v252 = vmul.f32 %v244, 0.01
        %v253 = vmax.f32 %v237, %v245
        %v254 = vmax.f32 %v238, %v246
        %v255 = vmax.f32 %v239, %v247
        %v256 = vmax.f32 %v240, %v248
        %v257 = vmax.f32 %v241, %v249
        %v258 = vmax.f32 %v242, %v250
        %v259 = vmax.f32 %v243, %v251
        %v260 = vmax.f32 %v244, %v252
        %v261 = vld [vmem:[#allocation5] sm:$0xff]
        %v262 = vld [vmem:[#allocation5 + $0x8] sm:$0xff]
        %v263 = vld [vmem:[#allocation5 + $0x10] sm:$0xff]
        %v264 = vld [vmem:[#allocation5 + $0x18] sm:$0xff]
        %v265 = vld [vmem:[#allocation5 + $0x20] sm:$0xff]
        %v266 = vld [vmem:[#allocation5 + $0x28] sm:$0xff]
        %vm267 = vcmask 64512
        %v269 = vsel %vm267, %v261, 0
        %v272 = vsel %vm267, %v262, 0
        %v275 = vsel %vm267, %v263, 0
        %v278 = vsel %vm267, %v264, 0
        %v281 = vsel %vm267, %v265, 0
        %v284 = vsel %vm267, %v266, 0
        %286 = vmatprep.subr.mxu0 0.0
        %287 = vmatpush1.msra.mxu0 0.0
        %288 = vmatprep.subr.mxu0 0.0
        %289 = vmatpush1.msra.mxu0 0.0
        %290 = vmatprep.subr.mxu0 0.0
        %291 = vmatpush1.msra.mxu0 0.0
        %292 = vmatprep.subr.mxu0 0.0
        %293 = vmatpush1.msra.mxu0 0.0
        %294 = vmatprep.subr.mxu0 0.0
        %295 = vmatpush1.msra.mxu0 0.0
        %296 = vmatprep.subr.mxu0 0.0
        %297 = vmatpush1.msra.mxu0 0.0
        %298 = vmatprep.subr.mxu0 0.0
        %299 = vmatpush1.msra.mxu0 0.0
        %300 = vmatprep.subr.mxu0 0.0
        %301 = vmatpush1.msra.mxu0 0.0
        %302 = vmatprep.subr.mxu0 0.0
        %303 = vmatpush1.msra.mxu0 0.0
        %304 = vmatprep.subr.mxu0 0.0
        %305 = vmatpush1.msra.mxu0 0.0
        %306 = vmatprep.subr.mxu0 0.0
        %307 = vmatpush1.msra.mxu0 0.0
        %308 = vmatprep.subr.mxu0 0.0
        %309 = vmatpush1.msra.mxu0 0.0
        %310 = vmatprep.subr.mxu0 0.0
        %311 = vmatpush1.msra.mxu0 0.0
        %312 = vmatprep.subr.mxu0 0.0
        %313 = vmatpush1.msra.mxu0 0.0
        %314 = vmatprep.subr.mxu0 0.0
        %315 = vmatpush1.msra.mxu0 0.0
        %316 = vmatprep.subr.mxu0 %v254
        %317 = vmatpush1.msra.mxu0 %v253
        %318 = vmatprep.subr.mxu0 0.0
        %319 = vmatpush2.msra.mxu0 0.0
        %320 = vmatprep.subr.mxu0 0.0
        %321 = vmatpush2.msra.mxu0 0.0
        %322 = vmatprep.subr.mxu0 0.0
        %323 = vmatpush2.msra.mxu0 0.0
        %324 = vmatprep.subr.mxu0 0.0
        %325 = vmatpush2.msra.mxu0 0.0
        %326 = vmatprep.subr.mxu0 0.0
        %327 = vmatpush2.msra.mxu0 0.0
        %328 = vmatprep.subr.mxu0 0.0
        %329 = vmatpush2.msra.mxu0 0.0
        %330 = vmatprep.subr.mxu0 0.0
        %331 = vmatpush2.msra.mxu0 0.0
        %332 = vmatprep.subr.mxu0 0.0
        %333 = vmatpush2.msra.mxu0 0.0
        %334 = vmatprep.subr.mxu0 0.0
        %335 = vmatpush2.msra.mxu0 0.0
        %336 = vmatprep.subr.mxu0 0.0
        %337 = vmatpush2.msra.mxu0 0.0
        %338 = vmatprep.subr.mxu0 0.0
        %339 = vmatpush2.msra.mxu0 0.0
        %340 = vmatprep.subr.mxu0 0.0
        %341 = vmatpush2.msra.mxu0 0.0
        %342 = vmatprep.subr.mxu0 0.0
        %343 = vmatpush2.msra.mxu0 0.0
        %344 = vmatprep.subr.mxu0 0.0
        %345 = vmatpush2.msra.mxu0 0.0
        %346 = vmatprep.subr.mxu0 0.0
        %347 = vmatpush2.msra.mxu0 0.0
        %348 = vmatprep.subr.mxu0 0.0
        %349 = vmatpush2.msra.mxu0 0.0
        %350 = vmatprep.mubr.f32.mxu0 0.0
        %351 = vmatmul.mubr.f32.gmra.mxu0 %v269
        %v352 = vpop.f32.mrf.mxu0
        %v353 = vadd.f32 0.0, %v352
        %v354 = vpop.f32.mrf.mxu0
        %v355 = vadd.f32 0.0, %v354
        %356 = vmatprep.mubr.f32.mxu0 0.0
        %357 = vmatmul.mubr.f32.gmra.mxu0 %v272
        %v358 = vpop.f32.mrf.mxu0
        %v359 = vadd.f32 0.0, %v358
        %v360 = vpop.f32.mrf.mxu0
        %v361 = vadd.f32 0.0, %v360
        %362 = vmatprep.mubr.f32.mxu0 0.0
        %363 = vmatmul.mubr.f32.gmra.mxu0 %v275
        %v364 = vpop.f32.mrf.mxu0
        %v365 = vadd.f32 0.0, %v364
        %v366 = vpop.f32.mrf.mxu0
        %v367 = vadd.f32 0.0, %v366
        %368 = vmatprep.mubr.f32.mxu0 0.0
        %369 = vmatmul.mubr.f32.gmra.mxu0 %v278
        %v370 = vpop.f32.mrf.mxu0
        %v371 = vadd.f32 0.0, %v370
        %v372 = vpop.f32.mrf.mxu0
        %v373 = vadd.f32 0.0, %v372
        %374 = vmatprep.mubr.f32.mxu0 0.0
        %375 = vmatmul.mubr.f32.gmra.mxu0 %v281
        %v376 = vpop.f32.mrf.mxu0
        %v377 = vadd.f32 0.0, %v376
        %v378 = vpop.f32.mrf.mxu0
        %v379 = vadd.f32 0.0, %v378
        %380 = vmatprep.mubr.f32.mxu0 0.0
        %381 = vmatmul.mubr.f32.gmra.mxu0 %v284
        %v382 = vpop.f32.mrf.mxu0
        %v383 = vadd.f32 0.0, %v382
        %v384 = vpop.f32.mrf.mxu0
        %v385 = vadd.f32 0.0, %v384
        %386 = vdwg.mxu0
        %387 = vmatprep.subr.mxu0 0.0
        %388 = vmatpush1.msra.mxu0 0.0
        %389 = vmatprep.subr.mxu0 0.0
        %390 = vmatpush1.msra.mxu0 0.0
        %391 = vmatprep.subr.mxu0 0.0
        %392 = vmatpush1.msra.mxu0 0.0
        %393 = vmatprep.subr.mxu0 0.0
        %394 = vmatpush1.msra.mxu0 0.0
        %395 = vmatprep.subr.mxu0 0.0
        %396 = vmatpush1.msra.mxu0 0.0
        %397 = vmatprep.subr.mxu0 0.0
        %398 = vmatpush1.msra.mxu0 0.0
        %399 = vmatprep.subr.mxu0 0.0
        %400 = vmatpush1.msra.mxu0 0.0
        %401 = vmatprep.subr.mxu0 0.0
        %402 = vmatpush1.msra.mxu0 0.0
        %403 = vmatprep.subr.mxu0 0.0
        %404 = vmatpush1.msra.mxu0 0.0
        %405 = vmatprep.subr.mxu0 0.0
        %406 = vmatpush1.msra.mxu0 0.0
        %407 = vmatprep.subr.mxu0 0.0
        %408 = vmatpush1.msra.mxu0 0.0
        %409 = vmatprep.subr.mxu0 0.0
        %410 = vmatpush1.msra.mxu0 0.0
        %411 = vmatprep.subr.mxu0 0.0
        %412 = vmatpush1.msra.mxu0 0.0
        %413 = vmatprep.subr.mxu0 0.0
        %414 = vmatpush1.msra.mxu0 0.0
        %415 = vmatprep.subr.mxu0 0.0
        %416 = vmatpush1.msra.mxu0 0.0
        %417 = vmatprep.subr.mxu0 %v256
        %418 = vmatpush1.msra.mxu0 %v255
        %419 = vmatprep.subr.mxu0 0.0
        %420 = vmatpush2.msra.mxu0 0.0
        %421 = vmatprep.subr.mxu0 0.0
        %422 = vmatpush2.msra.mxu0 0.0
        %423 = vmatprep.subr.mxu0 0.0
        %424 = vmatpush2.msra.mxu0 0.0
        %425 = vmatprep.subr.mxu0 0.0
        %426 = vmatpush2.msra.mxu0 0.0
        %427 = vmatprep.subr.mxu0 0.0
        %428 = vmatpush2.msra.mxu0 0.0
        %429 = vmatprep.subr.mxu0 0.0
        %430 = vmatpush2.msra.mxu0 0.0
        %431 = vmatprep.subr.mxu0 0.0
        %432 = vmatpush2.msra.mxu0 0.0
        %433 = vmatprep.subr.mxu0 0.0
        %434 = vmatpush2.msra.mxu0 0.0
        %435 = vmatprep.subr.mxu0 0.0
        %436 = vmatpush2.msra.mxu0 0.0
        %437 = vmatprep.subr.mxu0 0.0
        %438 = vmatpush2.msra.mxu0 0.0
        %439 = vmatprep.subr.mxu0 0.0
        %440 = vmatpush2.msra.mxu0 0.0
        %441 = vmatprep.subr.mxu0 0.0
        %442 = vmatpush2.msra.mxu0 0.0
        %443 = vmatprep.subr.mxu0 0.0
        %444 = vmatpush2.msra.mxu0 0.0
        %445 = vmatprep.subr.mxu0 0.0
        %446 = vmatpush2.msra.mxu0 0.0
        %447 = vmatprep.subr.mxu0 0.0
        %448 = vmatpush2.msra.mxu0 0.0
        %449 = vmatprep.subr.mxu0 0.0
        %450 = vmatpush2.msra.mxu0 0.0
        %451 = vmatprep.mubr.f32.mxu0 0.0
        %452 = vmatmul.mubr.f32.gmra.mxu0 %v269
        %v453 = vpop.f32.mrf.mxu0
        %v454 = vadd.f32 0.0, %v453
        %v455 = vpop.f32.mrf.mxu0
        %v456 = vadd.f32 0.0, %v455
        %457 = vmatprep.mubr.f32.mxu0 0.0
        %458 = vmatmul.mubr.f32.gmra.mxu0 %v272
        %v459 = vpop.f32.mrf.mxu0
        %v460 = vadd.f32 0.0, %v459
        %v461 = vpop.f32.mrf.mxu0
        %v462 = vadd.f32 0.0, %v461
        %463 = vmatprep.mubr.f32.mxu0 0.0
        %464 = vmatmul.mubr.f32.gmra.mxu0 %v275
        %v465 = vpop.f32.mrf.mxu0
        %v466 = vadd.f32 0.0, %v465
        %v467 = vpop.f32.mrf.mxu0
        %v468 = vadd.f32 0.0, %v467
        %469 = vmatprep.mubr.f32.mxu0 0.0
        %470 = vmatmul.mubr.f32.gmra.mxu0 %v278
        %v471 = vpop.f32.mrf.mxu0
        %v472 = vadd.f32 0.0, %v471
        %v473 = vpop.f32.mrf.mxu0
        %v474 = vadd.f32 0.0, %v473
        %475 = vmatprep.mubr.f32.mxu0 0.0
        %476 = vmatmul.mubr.f32.gmra.mxu0 %v281
        %v477 = vpop.f32.mrf.mxu0
        %v478 = vadd.f32 0.0, %v477
        %v479 = vpop.f32.mrf.mxu0
        %v480 = vadd.f32 0.0, %v479
        %481 = vmatprep.mubr.f32.mxu0 0.0
        %482 = vmatmul.mubr.f32.gmra.mxu0 %v284
        %v483 = vpop.f32.mrf.mxu0
        %v484 = vadd.f32 0.0, %v483
        %v485 = vpop.f32.mrf.mxu0
        %v486 = vadd.f32 0.0, %v485
        %487 = vdwg.mxu0
        %488 = vmatprep.subr.mxu0 0.0
        %489 = vmatpush1.msra.mxu0 0.0
        %490 = vmatprep.subr.mxu0 0.0
        %491 = vmatpush1.msra.mxu0 0.0
        %492 = vmatprep.subr.mxu0 0.0
        %493 = vmatpush1.msra.mxu0 0.0
        %494 = vmatprep.subr.mxu0 0.0
        %495 = vmatpush1.msra.mxu0 0.0
        %496 = vmatprep.subr.mxu0 0.0
        %497 = vmatpush1.msra.mxu0 0.0
        %498 = vmatprep.subr.mxu0 0.0
        %499 = vmatpush1.msra.mxu0 0.0
        %500 = vmatprep.subr.mxu0 0.0
        %501 = vmatpush1.msra.mxu0 0.0
        %502 = vmatprep.subr.mxu0 0.0
        %503 = vmatpush1.msra.mxu0 0.0
        %504 = vmatprep.subr.mxu0 0.0
        %505 = vmatpush1.msra.mxu0 0.0
        %506 = vmatprep.subr.mxu0 0.0
        %507 = vmatpush1.msra.mxu0 0.0
        %508 = vmatprep.subr.mxu0 0.0
        %509 = vmatpush1.msra.mxu0 0.0
        %510 = vmatprep.subr.mxu0 0.0
        %511 = vmatpush1.msra.mxu0 0.0
        %512 = vmatprep.subr.mxu0 0.0
        %513 = vmatpush1.msra.mxu0 0.0
        %514 = vmatprep.subr.mxu0 0.0
        %515 = vmatpush1.msra.mxu0 0.0
        %516 = vmatprep.subr.mxu0 0.0
        %517 = vmatpush1.msra.mxu0 0.0
        %518 = vmatprep.subr.mxu0 %v258
        %519 = vmatpush1.msra.mxu0 %v257
        %520 = vmatprep.subr.mxu0 0.0
        %521 = vmatpush2.msra.mxu0 0.0
        %522 = vmatprep.subr.mxu0 0.0
        %523 = vmatpush2.msra.mxu0 0.0
        %524 = vmatprep.subr.mxu0 0.0
        %525 = vmatpush2.msra.mxu0 0.0
        %526 = vmatprep.subr.mxu0 0.0
        %527 = vmatpush2.msra.mxu0 0.0
        %528 = vmatprep.subr.mxu0 0.0
        %529 = vmatpush2.msra.mxu0 0.0
        %530 = vmatprep.subr.mxu0 0.0
        %531 = vmatpush2.msra.mxu0 0.0
        %532 = vmatprep.subr.mxu0 0.0
        %533 = vmatpush2.msra.mxu0 0.0
        %534 = vmatprep.subr.mxu0 0.0
        %535 = vmatpush2.msra.mxu0 0.0
        %536 = vmatprep.subr.mxu0 0.0
        %537 = vmatpush2.msra.mxu0 0.0
        %538 = vmatprep.subr.mxu0 0.0
        %539 = vmatpush2.msra.mxu0 0.0
        %540 = vmatprep.subr.mxu0 0.0
        %541 = vmatpush2.msra.mxu0 0.0
        %542 = vmatprep.subr.mxu0 0.0
        %543 = vmatpush2.msra.mxu0 0.0
        %544 = vmatprep.subr.mxu0 0.0
        %545 = vmatpush2.msra.mxu0 0.0
        %546 = vmatprep.subr.mxu0 0.0
        %547 = vmatpush2.msra.mxu0 0.0
        %548 = vmatprep.subr.mxu0 0.0
        %549 = vmatpush2.msra.mxu0 0.0
        %550 = vmatprep.subr.mxu0 0.0
        %551 = vmatpush2.msra.mxu0 0.0
        %552 = vmatprep.mubr.f32.mxu0 0.0
        %553 = vmatmul.mubr.f32.gmra.mxu0 %v269
        %v554 = vpop.f32.mrf.mxu0
        %v555 = vadd.f32 0.0, %v554
        %v556 = vpop.f32.mrf.mxu0
        %v557 = vadd.f32 0.0, %v556
        %558 = vmatprep.mubr.f32.mxu0 0.0
        %559 = vmatmul.mubr.f32.gmra.mxu0 %v272
        %v560 = vpop.f32.mrf.mxu0
        %v561 = vadd.f32 0.0, %v560
        %v562 = vpop.f32.mrf.mxu0
        %v563 = vadd.f32 0.0, %v562
        %564 = vmatprep.mubr.f32.mxu0 0.0
        %565 = vmatmul.mubr.f32.gmra.mxu0 %v275
        %v566 = vpop.f32.mrf.mxu0
        %v567 = vadd.f32 0.0, %v566
        %v568 = vpop.f32.mrf.mxu0
        %v569 = vadd.f32 0.0, %v568
        %570 = vmatprep.mubr.f32.mxu0 0.0
        %571 = vmatmul.mubr.f32.gmra.mxu0 %v278
        %v572 = vpop.f32.mrf.mxu0
        %v573 = vadd.f32 0.0, %v572
        %v574 = vpop.f32.mrf.mxu0
        %v575 = vadd.f32 0.0, %v574
        %576 = vmatprep.mubr.f32.mxu0 0.0
        %577 = vmatmul.mubr.f32.gmra.mxu0 %v281
        %v578 = vpop.f32.mrf.mxu0
        %v579 = vadd.f32 0.0, %v578
        %v580 = vpop.f32.mrf.mxu0
        %v581 = vadd.f32 0.0, %v580
        %582 = vmatprep.mubr.f32.mxu0 0.0
        %583 = vmatmul.mubr.f32.gmra.mxu0 %v284
        %v584 = vpop.f32.mrf.mxu0
        %v585 = vadd.f32 0.0, %v584
        %v586 = vpop.f32.mrf.mxu0
        %v587 = vadd.f32 0.0, %v586
        %588 = vdwg.mxu0
        %589 = vmatprep.subr.mxu0 0.0
        %590 = vmatpush1.msra.mxu0 0.0
        %591 = vmatprep.subr.mxu0 0.0
        %592 = vmatpush1.msra.mxu0 0.0
        %593 = vmatprep.subr.mxu0 0.0
        %594 = vmatpush1.msra.mxu0 0.0
        %595 = vmatprep.subr.mxu0 0.0
        %596 = vmatpush1.msra.mxu0 0.0
        %597 = vmatprep.subr.mxu0 0.0
        %598 = vmatpush1.msra.mxu0 0.0
        %599 = vmatprep.subr.mxu0 0.0
        %600 = vmatpush1.msra.mxu0 0.0
        %601 = vmatprep.subr.mxu0 0.0
        %602 = vmatpush1.msra.mxu0 0.0
        %603 = vmatprep.subr.mxu0 0.0
        %604 = vmatpush1.msra.mxu0 0.0
        %605 = vmatprep.subr.mxu0 0.0
        %606 = vmatpush1.msra.mxu0 0.0
        %607 = vmatprep.subr.mxu0 0.0
        %608 = vmatpush1.msra.mxu0 0.0
        %609 = vmatprep.subr.mxu0 0.0
        %610 = vmatpush1.msra.mxu0 0.0
        %611 = vmatprep.subr.mxu0 0.0
        %612 = vmatpush1.msra.mxu0 0.0
        %613 = vmatprep.subr.mxu0 0.0
        %614 = vmatpush1.msra.mxu0 0.0
        %615 = vmatprep.subr.mxu0 0.0
        %616 = vmatpush1.msra.mxu0 0.0
        %617 = vmatprep.subr.mxu0 0.0
        %618 = vmatpush1.msra.mxu0 0.0
        %619 = vmatprep.subr.mxu0 %v260
        %620 = vmatpush1.msra.mxu0 %v259
        %621 = vmatprep.subr.mxu0 0.0
        %622 = vmatpush2.msra.mxu0 0.0
        %623 = vmatprep.subr.mxu0 0.0
        %624 = vmatpush2.msra.mxu0 0.0
        %625 = vmatprep.subr.mxu0 0.0
        %626 = vmatpush2.msra.mxu0 0.0
        %627 = vmatprep.subr.mxu0 0.0
        %628 = vmatpush2.msra.mxu0 0.0
        %629 = vmatprep.subr.mxu0 0.0
        %630 = vmatpush2.msra.mxu0 0.0
        %631 = vmatprep.subr.mxu0 0.0
        %632 = vmatpush2.msra.mxu0 0.0
        %633 = vmatprep.subr.mxu0 0.0
        %634 = vmatpush2.msra.mxu0 0.0
        %635 = vmatprep.subr.mxu0 0.0
        %636 = vmatpush2.msra.mxu0 0.0
        %637 = vmatprep.subr.mxu0 0.0
        %638 = vmatpush2.msra.mxu0 0.0
        %639 = vmatprep.subr.mxu0 0.0
        %640 = vmatpush2.msra.mxu0 0.0
        %641 = vmatprep.subr.mxu0 0.0
        %642 = vmatpush2.msra.mxu0 0.0
        %643 = vmatprep.subr.mxu0 0.0
        %644 = vmatpush2.msra.mxu0 0.0
        %645 = vmatprep.subr.mxu0 0.0
        %646 = vmatpush2.msra.mxu0 0.0
        %647 = vmatprep.subr.mxu0 0.0
        %648 = vmatpush2.msra.mxu0 0.0
        %649 = vmatprep.subr.mxu0 0.0
        %650 = vmatpush2.msra.mxu0 0.0
        %651 = vmatprep.subr.mxu0 0.0
        %652 = vmatpush2.msra.mxu0 0.0
        %653 = vmatprep.mubr.f32.mxu0 0.0
        %654 = vmatmul.mubr.f32.gmra.mxu0 %v269
        %v655 = vpop.f32.mrf.mxu0
        %v656 = vadd.f32 0.0, %v655
        %v657 = vpop.f32.mrf.mxu0
        %v658 = vadd.f32 0.0, %v657
        %659 = vmatprep.mubr.f32.mxu0 0.0
        %660 = vmatmul.mubr.f32.gmra.mxu0 %v272
        %v661 = vpop.f32.mrf.mxu0
        %v662 = vadd.f32 0.0, %v661
        %v663 = vpop.f32.mrf.mxu0
        %v664 = vadd.f32 0.0, %v663
        %665 = vmatprep.mubr.f32.mxu0 0.0
        %666 = vmatmul.mubr.f32.gmra.mxu0 %v275
        %v667 = vpop.f32.mrf.mxu0
        %v668 = vadd.f32 0.0, %v667
        %v669 = vpop.f32.mrf.mxu0
        %v670 = vadd.f32 0.0, %v669
        %671 = vmatprep.mubr.f32.mxu0 0.0
        %672 = vmatmul.mubr.f32.gmra.mxu0 %v278
        %v673 = vpop.f32.mrf.mxu0
        %v674 = vadd.f32 0.0, %v673
        %v675 = vpop.f32.mrf.mxu0
        %v676 = vadd.f32 0.0, %v675
        %677 = vmatprep.mubr.f32.mxu0 0.0
        %678 = vmatmul.mubr.f32.gmra.mxu0 %v281
        %v679 = vpop.f32.mrf.mxu0
        %v680 = vadd.f32 0.0, %v679
        %v681 = vpop.f32.mrf.mxu0
        %v682 = vadd.f32 0.0, %v681
        %683 = vmatprep.mubr.f32.mxu0 0.0
        %684 = vmatmul.mubr.f32.gmra.mxu0 %v284
        %v685 = vpop.f32.mrf.mxu0
        %v686 = vadd.f32 0.0, %v685
        %v687 = vpop.f32.mrf.mxu0
        %v688 = vadd.f32 0.0, %v687
        %689 = vdwg.mxu0
        %v690 = vld [vmem:[#allocation5] sm:$0xff]
        %v691 = vld [vmem:[#allocation5 + $0x8] sm:$0xff]
        %v692 = vld [vmem:[#allocation5 + $0x10] sm:$0xff]
        %v693 = vmax.f32 %v353, %v371
        %v694 = vmax.f32 %v355, %v373
        %v695 = vmax.f32 %v454, %v472
        %v696 = vmax.f32 %v456, %v474
        %v697 = vmax.f32 %v555, %v573
        %v698 = vmax.f32 %v557, %v575
        %v699 = vmax.f32 %v656, %v674
        %v700 = vmax.f32 %v658, %v676
        %v701 = vmax.f32 %v359, %v377
        %v702 = vmax.f32 %v361, %v379
        %v703 = vmax.f32 %v460, %v478
        %v704 = vmax.f32 %v462, %v480
        %v705 = vmax.f32 %v561, %v579
        %v706 = vmax.f32 %v563, %v581
        %v707 = vmax.f32 %v662, %v680
        %v708 = vmax.f32 %v664, %v682
        %v709 = vmax.f32 %v365, %v383
        %v710 = vmax.f32 %v367, %v385
        %v711 = vmax.f32 %v466, %v484
        %v712 = vmax.f32 %v468, %v486
        %v713 = vmax.f32 %v567, %v585
        %v714 = vmax.f32 %v569, %v587
        %v715 = vmax.f32 %v668, %v686
        %v716 = vmax.f32 %v670, %v688
        %718 = vset.pattern.permute.xlu0 66
        %719 = vperm.xlu0 %718, %v690
        %v720 = vpop.permute.xlu0 %719
        %723 = vset.pattern.permute.xlu0 66
        %724 = vperm.xlu0 %723, %v691
        %v725 = vpop.permute.xlu0 %724
        %728 = vset.pattern.permute.xlu0 66
        %729 = vperm.xlu0 %728, %v692
        %v730 = vpop.permute.xlu0 %729
        %v732 = vadd.f32 %v693, %v720
        %v733 = vadd.f32 %v694, %v720
        %v734 = vadd.f32 %v695, %v720
        %v735 = vadd.f32 %v696, %v720
        %v736 = vadd.f32 %v697, %v720
        %v737 = vadd.f32 %v698, %v720
        %v738 = vadd.f32 %v699, %v720
        %v739 = vadd.f32 %v700, %v720
        %v740 = vadd.f32 %v701, %v725
        %v741 = vadd.f32 %v702, %v725
        %v742 = vadd.f32 %v703, %v725
        %v743 = vadd.f32 %v704, %v725
        %v744 = vadd.f32 %v705, %v725
        %v745 = vadd.f32 %v706, %v725
        %v746 = vadd.f32 %v707, %v725
        %v747 = vadd.f32 %v708, %v725
        %v748 = vadd.f32 %v709, %v730
        %v749 = vadd.f32 %v710, %v730
        %v750 = vadd.f32 %v711, %v730
        %v751 = vadd.f32 %v712, %v730
        %v752 = vadd.f32 %v713, %v730
        %v753 = vadd.f32 %v714, %v730
        %v754 = vadd.f32 %v715, %v730
        %v755 = vadd.f32 %v716, %v730
        %v756 = vmul.f32 %v732, 0.01
        %v757 = vmul.f32 %v733, 0.01
        %v758 = vmul.f32 %v734, 0.01
        %v759 = vmul.f32 %v735, 0.01
        %v760 = vmul.f32 %v736, 0.01
        %v761 = vmul.f32 %v737, 0.01
        %v762 = vmul.f32 %v738, 0.01
        %v763 = vmul.f32 %v739, 0.01
        %v764 = vmul.f32 %v740, 0.01
        %v765 = vmul.f32 %v741, 0.01
        %v766 = vmul.f32 %v742, 0.01
        %v767 = vmul.f32 %v743, 0.01
        %v768 = vmul.f32 %v744, 0.01
        %v769 = vmul.f32 %v745, 0.01
        %v770 = vmul.f32 %v746, 0.01
        %v771 = vmul.f32 %v747, 0.01
        %v772 = vmul.f32 %v748, 0.01
        %v773 = vmul.f32 %v749, 0.01
        %v774 = vmul.f32 %v750, 0.01
        %v775 = vmul.f32 %v751, 0.01
        %v776 = vmul.f32 %v752, 0.01
        %v777 = vmul.f32 %v753, 0.01
        %v778 = vmul.f32 %v754, 0.01
        %v779 = vmul.f32 %v755, 0.01
        %v780 = vmax.f32 %v732, %v756
        %v781 = vmax.f32 %v733, %v757
        %v782 = vmax.f32 %v734, %v758
        %v783 = vmax.f32 %v735, %v759
        %v784 = vmax.f32 %v736, %v760
        %v785 = vmax.f32 %v737, %v761
        %v786 = vmax.f32 %v738, %v762
        %v787 = vmax.f32 %v739, %v763
        %v788 = vmax.f32 %v740, %v764
        %v789 = vmax.f32 %v741, %v765
        %v790 = vmax.f32 %v742, %v766
        %v791 = vmax.f32 %v743, %v767
        %v792 = vmax.f32 %v744, %v768
        %v793 = vmax.f32 %v745, %v769
        %v794 = vmax.f32 %v746, %v770
        %v795 = vmax.f32 %v747, %v771
        %v796 = vmax.f32 %v748, %v772
        %v797 = vmax.f32 %v749, %v773
        %v798 = vmax.f32 %v750, %v774
        %v799 = vmax.f32 %v751, %v775
        %v800 = vmax.f32 %v752, %v776
        %v801 = vmax.f32 %v753, %v777
        %v802 = vmax.f32 %v754, %v778
        %v803 = vmax.f32 %v755, %v779
        %v804 = vld [vmem:[#allocation5 + $0x30] sm:$0xff]
        %805 = vset.pattern.permute.xlu0 67
        %806 = vperm.xlu0 %805, %v178
        %v807 = vpop.permute.xlu0 %806
        %vm809 = vcmask 195584
        %v811 = vsel %vm809, %v804, 0
        %813 = vmatprep.subr.mxu0 0.0
        %814 = vmatpush1.msra.mxu0 0.0
        %815 = vmatprep.subr.mxu0 0.0
        %816 = vmatpush1.msra.mxu0 0.0
        %817 = vmatprep.subr.mxu0 0.0
        %818 = vmatpush1.msra.mxu0 0.0
        %819 = vmatprep.subr.mxu0 0.0
        %820 = vmatpush1.msra.mxu0 0.0
        %821 = vmatprep.subr.mxu0 0.0
        %822 = vmatpush1.msra.mxu0 0.0
        %823 = vmatprep.subr.mxu0 0.0
        %824 = vmatpush1.msra.mxu0 0.0
        %825 = vmatprep.subr.mxu0 0.0
        %826 = vmatpush1.msra.mxu0 0.0
        %827 = vmatprep.subr.mxu0 0.0
        %828 = vmatpush1.msra.mxu0 0.0
        %829 = vmatprep.subr.mxu0 0.0
        %830 = vmatpush1.msra.mxu0 0.0
        %831 = vmatprep.subr.mxu0 0.0
        %832 = vmatpush1.msra.mxu0 0.0
        %833 = vmatprep.subr.mxu0 0.0
        %834 = vmatpush1.msra.mxu0 0.0
        %835 = vmatprep.subr.mxu0 0.0
        %836 = vmatpush1.msra.mxu0 0.0
        %837 = vmatprep.subr.mxu0 0.0
        %838 = vmatpush1.msra.mxu0 0.0
        %839 = vmatprep.subr.mxu0 %v797
        %840 = vmatpush1.msra.mxu0 %v796
        %841 = vmatprep.subr.mxu0 %v789
        %842 = vmatpush1.msra.mxu0 %v788
        %843 = vmatprep.subr.mxu0 %v781
        %844 = vmatpush1.msra.mxu0 %v780
        %845 = vmatprep.subr.mxu0 0.0
        %846 = vmatpush2.msra.mxu0 0.0
        %847 = vmatprep.subr.mxu0 0.0
        %848 = vmatpush2.msra.mxu0 0.0
        %849 = vmatprep.subr.mxu0 0.0
        %850 = vmatpush2.msra.mxu0 0.0
        %851 = vmatprep.subr.mxu0 0.0
        %852 = vmatpush2.msra.mxu0 0.0
        %853 = vmatprep.subr.mxu0 0.0
        %854 = vmatpush2.msra.mxu0 0.0
        %855 = vmatprep.subr.mxu0 0.0
        %856 = vmatpush2.msra.mxu0 0.0
        %857 = vmatprep.subr.mxu0 0.0
        %858 = vmatpush2.msra.mxu0 0.0
        %859 = vmatprep.subr.mxu0 0.0
        %860 = vmatpush2.msra.mxu0 0.0
        %861 = vmatprep.subr.mxu0 0.0
        %862 = vmatpush2.msra.mxu0 0.0
        %863 = vmatprep.subr.mxu0 0.0
        %864 = vmatpush2.msra.mxu0 0.0
        %865 = vmatprep.subr.mxu0 0.0
        %866 = vmatpush2.msra.mxu0 0.0
        %867 = vmatprep.subr.mxu0 0.0
        %868 = vmatpush2.msra.mxu0 0.0
        %869 = vmatprep.subr.mxu0 0.0
        %870 = vmatpush2.msra.mxu0 0.0
        %871 = vmatprep.subr.mxu0 0.0
        %872 = vmatpush2.msra.mxu0 0.0
        %873 = vmatprep.subr.mxu0 0.0
        %874 = vmatpush2.msra.mxu0 0.0
        %875 = vmatprep.subr.mxu0 0.0
        %876 = vmatpush2.msra.mxu0 0.0
        %877 = vmatprep.mubr.f32.mxu0 0.0
        %878 = vmatmul.mubr.f32.gmra.mxu0 %v811
        %v879 = vpop.f32.mrf.mxu0
        %v880 = vadd.f32 %v807, %v879
        %v881 = vpop.f32.mrf.mxu0
        %v882 = vadd.f32 %v807, %v881
        %883 = vdwg.mxu0
        %884 = vmatprep.subr.mxu0 0.0
        %885 = vmatpush1.msra.mxu0 0.0
        %886 = vmatprep.subr.mxu0 0.0
        %887 = vmatpush1.msra.mxu0 0.0
        %888 = vmatprep.subr.mxu0 0.0
        %889 = vmatpush1.msra.mxu0 0.0
        %890 = vmatprep.subr.mxu0 0.0
        %891 = vmatpush1.msra.mxu0 0.0
        %892 = vmatprep.subr.mxu0 0.0
        %893 = vmatpush1.msra.mxu0 0.0
        %894 = vmatprep.subr.mxu0 0.0
        %895 = vmatpush1.msra.mxu0 0.0
        %896 = vmatprep.subr.mxu0 0.0
        %897 = vmatpush1.msra.mxu0 0.0
        %898 = vmatprep.subr.mxu0 0.0
        %899 = vmatpush1.msra.mxu0 0.0
        %900 = vmatprep.subr.mxu0 0.0
        %901 = vmatpush1.msra.mxu0 0.0
        %902 = vmatprep.subr.mxu0 0.0
        %903 = vmatpush1.msra.mxu0 0.0
        %904 = vmatprep.subr.mxu0 0.0
        %905 = vmatpush1.msra.mxu0 0.0
        %906 = vmatprep.subr.mxu0 0.0
        %907 = vmatpush1.msra.mxu0 0.0
        %908 = vmatprep.subr.mxu0 0.0
        %909 = vmatpush1.msra.mxu0 0.0
        %910 = vmatprep.subr.mxu0 %v799
        %911 = vmatpush1.msra.mxu0 %v798
        %912 = vmatprep.subr.mxu0 %v791
        %913 = vmatpush1.msra.mxu0 %v790
        %914 = vmatprep.subr.mxu0 %v783
        %915 = vmatpush1.msra.mxu0 %v782
        %916 = vmatprep.subr.mxu0 0.0
        %917 = vmatpush2.msra.mxu0 0.0
        %918 = vmatprep.subr.mxu0 0.0
        %919 = vmatpush2.msra.mxu0 0.0
        %920 = vmatprep.subr.mxu0 0.0
        %921 = vmatpush2.msra.mxu0 0.0
        %922 = vmatprep.subr.mxu0 0.0
        %923 = vmatpush2.msra.mxu0 0.0
        %924 = vmatprep.subr.mxu0 0.0
        %925 = vmatpush2.msra.mxu0 0.0
        %926 = vmatprep.subr.mxu0 0.0
        %927 = vmatpush2.msra.mxu0 0.0
        %928 = vmatprep.subr.mxu0 0.0
        %929 = vmatpush2.msra.mxu0 0.0
        %930 = vmatprep.subr.mxu0 0.0
        %931 = vmatpush2.msra.mxu0 0.0
        %932 = vmatprep.subr.mxu0 0.0
        %933 = vmatpush2.msra.mxu0 0.0
        %934 = vmatprep.subr.mxu0 0.0
        %935 = vmatpush2.msra.mxu0 0.0
        %936 = vmatprep.subr.mxu0 0.0
        %937 = vmatpush2.msra.mxu0 0.0
        %938 = vmatprep.subr.mxu0 0.0
        %939 = vmatpush2.msra.mxu0 0.0
        %940 = vmatprep.subr.mxu0 0.0
        %941 = vmatpush2.msra.mxu0 0.0
        %942 = vmatprep.subr.mxu0 0.0
        %943 = vmatpush2.msra.mxu0 0.0
        %944 = vmatprep.subr.mxu0 0.0
        %945 = vmatpush2.msra.mxu0 0.0
        %946 = vmatprep.subr.mxu0 0.0
        %947 = vmatpush2.msra.mxu0 0.0
        %948 = vmatprep.mubr.f32.mxu0 0.0
        %949 = vmatmul.mubr.f32.gmra.mxu0 %v811
        %v950 = vpop.f32.mrf.mxu0
        %v951 = vadd.f32 %v807, %v950
        %v952 = vpop.f32.mrf.mxu0
        %v953 = vadd.f32 %v807, %v952
        %954 = vdwg.mxu0
        %955 = vmatprep.subr.mxu0 0.0
        %956 = vmatpush1.msra.mxu0 0.0
        %957 = vmatprep.subr.mxu0 0.0
        %958 = vmatpush1.msra.mxu0 0.0
        %959 = vmatprep.subr.mxu0 0.0
        %960 = vmatpush1.msra.mxu0 0.0
        %961 = vmatprep.subr.mxu0 0.0
        %962 = vmatpush1.msra.mxu0 0.0
        %963 = vmatprep.subr.mxu0 0.0
        %964 = vmatpush1.msra.mxu0 0.0
        %965 = vmatprep.subr.mxu0 0.0
        %966 = vmatpush1.msra.mxu0 0.0
        %967 = vmatprep.subr.mxu0 0.0
        %968 = vmatpush1.msra.mxu0 0.0
        %969 = vmatprep.subr.mxu0 0.0
        %970 = vmatpush1.msra.mxu0 0.0
        %971 = vmatprep.subr.mxu0 0.0
        %972 = vmatpush1.msra.mxu0 0.0
        %973 = vmatprep.subr.mxu0 0.0
        %974 = vmatpush1.msra.mxu0 0.0
        %975 = vmatprep.subr.mxu0 0.0
        %976 = vmatpush1.msra.mxu0 0.0
        %977 = vmatprep.subr.mxu0 0.0
        %978 = vmatpush1.msra.mxu0 0.0
        %979 = vmatprep.subr.mxu0 0.0
        %980 = vmatpush1.msra.mxu0 0.0
        %981 = vmatprep.subr.mxu0 %v801
        %982 = vmatpush1.msra.mxu0 %v800
        %983 = vmatprep.subr.mxu0 %v793
        %984 = vmatpush1.msra.mxu0 %v792
        %985 = vmatprep.subr.mxu0 %v785
        %986 = vmatpush1.msra.mxu0 %v784
        %987 = vmatprep.subr.mxu0 0.0
        %988 = vmatpush2.msra.mxu0 0.0
        %989 = vmatprep.subr.mxu0 0.0
        %990 = vmatpush2.msra.mxu0 0.0
        %991 = vmatprep.subr.mxu0 0.0
        %992 = vmatpush2.msra.mxu0 0.0
        %993 = vmatprep.subr.mxu0 0.0
        %994 = vmatpush2.msra.mxu0 0.0
        %995 = vmatprep.subr.mxu0 0.0
        %996 = vmatpush2.msra.mxu0 0.0
        %997 = vmatprep.subr.mxu0 0.0
        %998 = vmatpush2.msra.mxu0 0.0
        %999 = vmatprep.subr.mxu0 0.0
        %1000 = vmatpush2.msra.mxu0 0.0
        %1001 = vmatprep.subr.mxu0 0.0
        %1002 = vmatpush2.msra.mxu0 0.0
        %1003 = vmatprep.subr.mxu0 0.0
        %1004 = vmatpush2.msra.mxu0 0.0
        %1005 = vmatprep.subr.mxu0 0.0
        %1006 = vmatpush2.msra.mxu0 0.0
        %1007 = vmatprep.subr.mxu0 0.0
        %1008 = vmatpush2.msra.mxu0 0.0
        %1009 = vmatprep.subr.mxu0 0.0
        %1010 = vmatpush2.msra.mxu0 0.0
        %1011 = vmatprep.subr.mxu0 0.0
        %1012 = vmatpush2.msra.mxu0 0.0
        %1013 = vmatprep.subr.mxu0 0.0
        %1014 = vmatpush2.msra.mxu0 0.0
        %1015 = vmatprep.subr.mxu0 0.0
        %1016 = vmatpush2.msra.mxu0 0.0
        %1017 = vmatprep.subr.mxu0 0.0
        %1018 = vmatpush2.msra.mxu0 0.0
        %1019 = vmatprep.mubr.f32.mxu0 0.0
        %1020 = vmatmul.mubr.f32.gmra.mxu0 %v811
        %v1021 = vpop.f32.mrf.mxu0
        %v1022 = vadd.f32 %v807, %v1021
        %v1023 = vpop.f32.mrf.mxu0
        %v1024 = vadd.f32 %v807, %v1023
        %1025 = vdwg.mxu0
        %1026 = vmatprep.subr.mxu0 0.0
        %1027 = vmatpush1.msra.mxu0 0.0
        %1028 = vmatprep.subr.mxu0 0.0
        %1029 = vmatpush1.msra.mxu0 0.0
        %1030 = vmatprep.subr.mxu0 0.0
        %1031 = vmatpush1.msra.mxu0 0.0
        %1032 = vmatprep.subr.mxu0 0.0
        %1033 = vmatpush1.msra.mxu0 0.0
        %1034 = vmatprep.subr.mxu0 0.0
        %1035 = vmatpush1.msra.mxu0 0.0
        %1036 = vmatprep.subr.mxu0 0.0
        %1037 = vmatpush1.msra.mxu0 0.0
        %1038 = vmatprep.subr.mxu0 0.0
        %1039 = vmatpush1.msra.mxu0 0.0
        %1040 = vmatprep.subr.mxu0 0.0
        %1041 = vmatpush1.msra.mxu0 0.0
        %1042 = vmatprep.subr.mxu0 0.0
        %1043 = vmatpush1.msra.mxu0 0.0
        %1044 = vmatprep.subr.mxu0 0.0
        %1045 = vmatpush1.msra.mxu0 0.0
        %1046 = vmatprep.subr.mxu0 0.0
        %1047 = vmatpush1.msra.mxu0 0.0
        %1048 = vmatprep.subr.mxu0 0.0
        %1049 = vmatpush1.msra.mxu0 0.0
        %1050 = vmatprep.subr.mxu0 0.0
        %1051 = vmatpush1.msra.mxu0 0.0
        %1052 = vmatprep.subr.mxu0 %v803
        %1053 = vmatpush1.msra.mxu0 %v802
        %1054 = vmatprep.subr.mxu0 %v795
        %1055 = vmatpush1.msra.mxu0 %v794
        %1056 = vmatprep.subr.mxu0 %v787
        %1057 = vmatpush1.msra.mxu0 %v786
        %1058 = vmatprep.subr.mxu0 0.0
        %1059 = vmatpush2.msra.mxu0 0.0
        %1060 = vmatprep.subr.mxu0 0.0
        %1061 = vmatpush2.msra.mxu0 0.0
        %1062 = vmatprep.subr.mxu0 0.0
        %1063 = vmatpush2.msra.mxu0 0.0
        %1064 = vmatprep.subr.mxu0 0.0
        %1065 = vmatpush2.msra.mxu0 0.0
        %1066 = vmatprep.subr.mxu0 0.0
        %1067 = vmatpush2.msra.mxu0 0.0
        %1068 = vmatprep.subr.mxu0 0.0
        %1069 = vmatpush2.msra.mxu0 0.0
        %1070 = vmatprep.subr.mxu0 0.0
        %1071 = vmatpush2.msra.mxu0 0.0
        %1072 = vmatprep.subr.mxu0 0.0
        %1073 = vmatpush2.msra.mxu0 0.0
        %1074 = vmatprep.subr.mxu0 0.0
        %1075 = vmatpush2.msra.mxu0 0.0
        %1076 = vmatprep.subr.mxu0 0.0
        %1077 = vmatpush2.msra.mxu0 0.0
        %1078 = vmatprep.subr.mxu0 0.0
        %1079 = vmatpush2.msra.mxu0 0.0
        %1080 = vmatprep.subr.mxu0 0.0
        %1081 = vmatpush2.msra.mxu0 0.0
        %1082 = vmatprep.subr.mxu0 0.0
        %1083 = vmatpush2.msra.mxu0 0.0
        %1084 = vmatprep.subr.mxu0 0.0
        %1085 = vmatpush2.msra.mxu0 0.0
        %1086 = vmatprep.subr.mxu0 0.0
        %1087 = vmatpush2.msra.mxu0 0.0
        %1088 = vmatprep.subr.mxu0 0.0
        %1089 = vmatpush2.msra.mxu0 0.0
        %1090 = vmatprep.mubr.f32.mxu0 0.0
        %1091 = vmatmul.mubr.f32.gmra.mxu0 %v811
        %v1092 = vpop.f32.mrf.mxu0
        %v1093 = vadd.f32 %v807, %v1092
        %v1094 = vpop.f32.mrf.mxu0
        %v1095 = vadd.f32 %v807, %v1094
        %1096 = vdwg.mxu0
        %v1097 = vmax.f32 %v880, 0.0
        %v1098 = vmax.f32 %v882, 0.0
        %v1099 = vmax.f32 %v951, 0.0
        %v1100 = vmax.f32 %v953, 0.0
        %v1101 = vmax.f32 %v1022, 0.0
        %v1102 = vmax.f32 %v1024, 0.0
        %v1103 = vmax.f32 %v1093, 0.0
        %v1104 = vmax.f32 %v1095, 0.0
        %v1105 = vmin.f32 %v880, 0.0
        %v1106 = vmin.f32 %v882, 0.0
        %v1107 = vmin.f32 %v951, 0.0
        %v1108 = vmin.f32 %v953, 0.0
        %v1109 = vmin.f32 %v1022, 0.0
        %v1110 = vmin.f32 %v1024, 0.0
        %v1111 = vmin.f32 %v1093, 0.0
        %v1112 = vmin.f32 %v1095, 0.0
        %v1113 = vmul.f32 %v1105, 1.442695
        %v1114 = vpow.pop %v1113
        %v1115 = vmul.f32 %v1106, 1.442695
        %v1116 = vpow.pop %v1115
        %v1117 = vmul.f32 %v1107, 1.442695
        %v1118 = vpow.pop %v1117
        %v1119 = vmul.f32 %v1108, 1.442695
        %v1120 = vpow.pop %v1119
        %v1121 = vmul.f32 %v1109, 1.442695
        %v1122 = vpow.pop %v1121
        %v1123 = vmul.f32 %v1110, 1.442695
        %v1124 = vpow.pop %v1123
        %v1125 = vmul.f32 %v1111, 1.442695
        %v1126 = vpow.pop %v1125
        %v1127 = vmul.f32 %v1112, 1.442695
        %v1128 = vpow.pop %v1127
        %v1129 = vsub.f32 %v1114, 1.0
        %v1130 = vsub.f32 %v1116, 1.0
        %v1131 = vsub.f32 %v1118, 1.0
        %v1132 = vsub.f32 %v1120, 1.0
        %v1133 = vsub.f32 %v1122, 1.0
        %v1134 = vsub.f32 %v1124, 1.0
        %v1135 = vsub.f32 %v1126, 1.0
        %v1136 = vsub.f32 %v1128, 1.0
        %v1137 = vadd.f32 %v1097, %v1129
        %v1138 = vadd.f32 %v1098, %v1130
        %v1139 = vadd.f32 %v1099, %v1131
        %v1140 = vadd.f32 %v1100, %v1132
        %v1141 = vadd.f32 %v1101, %v1133
        %v1142 = vadd.f32 %v1102, %v1134
        %v1143 = vadd.f32 %v1103, %v1135
        %v1144 = vadd.f32 %v1104, %v1136
        %v1145 = vld [vmem:[#allocation5 + $0x38] sm:$0xff]
        %v1146 = vld [vmem:[#allocation5 + $0x40] sm:$0xff]
        %v1147 = vld [vmem:[#allocation5 + $0x48] sm:$0xff]
        %1148 = vset.pattern.permute.xlu0 68
        %1149 = vperm.xlu0 %1148, %v690
        %v1150 = vpop.permute.xlu0 %1149
        %1152 = vset.pattern.permute.xlu0 68
        %1153 = vperm.xlu0 %1152, %v691
        %v1154 = vpop.permute.xlu0 %1153
        %1156 = vset.pattern.permute.xlu0 68
        %1157 = vperm.xlu0 %1156, %v692
        %v1158 = vpop.permute.xlu0 %1157
        %v1161 = vsel %vm267, %v1145, 0
        %v1164 = vsel %vm267, %v1146, 0
        %v1167 = vsel %vm267, %v1147, 0
        %1169 = vmatprep.subr.mxu0 0.0
        %1170 = vmatpush1.msra.mxu0 0.0
        %1171 = vmatprep.subr.mxu0 0.0
        %1172 = vmatpush1.msra.mxu0 0.0
        %1173 = vmatprep.subr.mxu0 0.0
        %1174 = vmatpush1.msra.mxu0 0.0
        %1175 = vmatprep.subr.mxu0 0.0
        %1176 = vmatpush1.msra.mxu0 0.0
        %1177 = vmatprep.subr.mxu0 0.0
        %1178 = vmatpush1.msra.mxu0 0.0
        %1179 = vmatprep.subr.mxu0 0.0
        %1180 = vmatpush1.msra.mxu0 0.0
        %1181 = vmatprep.subr.mxu0 0.0
        %1182 = vmatpush1.msra.mxu0 0.0
        %1183 = vmatprep.subr.mxu0 0.0
        %1184 = vmatpush1.msra.mxu0 0.0
        %1185 = vmatprep.subr.mxu0 0.0
        %1186 = vmatpush1.msra.mxu0 0.0
        %1187 = vmatprep.subr.mxu0 0.0
        %1188 = vmatpush1.msra.mxu0 0.0
        %1189 = vmatprep.subr.mxu0 0.0
        %1190 = vmatpush1.msra.mxu0 0.0
        %1191 = vmatprep.subr.mxu0 0.0
        %1192 = vmatpush1.msra.mxu0 0.0
        %1193 = vmatprep.subr.mxu0 0.0
        %1194 = vmatpush1.msra.mxu0 0.0
        %1195 = vmatprep.subr.mxu0 0.0
        %1196 = vmatpush1.msra.mxu0 0.0
        %1197 = vmatprep.subr.mxu0 0.0
        %1198 = vmatpush1.msra.mxu0 0.0
        %1199 = vmatprep.subr.mxu0 %v1138
        %1200 = vmatpush1.msra.mxu0 %v1137
        %1201 = vmatprep.subr.mxu0 0.0
        %1202 = vmatpush2.msra.mxu0 0.0
        %1203 = vmatprep.subr.mxu0 0.0
        %1204 = vmatpush2.msra.mxu0 0.0
        %1205 = vmatprep.subr.mxu0 0.0
        %1206 = vmatpush2.msra.mxu0 0.0
        %1207 = vmatprep.subr.mxu0 0.0
        %1208 = vmatpush2.msra.mxu0 0.0
        %1209 = vmatprep.subr.mxu0 0.0
        %1210 = vmatpush2.msra.mxu0 0.0
        %1211 = vmatprep.subr.mxu0 0.0
        %1212 = vmatpush2.msra.mxu0 0.0
        %1213 = vmatprep.subr.mxu0 0.0
        %1214 = vmatpush2.msra.mxu0 0.0
        %1215 = vmatprep.subr.mxu0 0.0
        %1216 = vmatpush2.msra.mxu0 0.0
        %1217 = vmatprep.subr.mxu0 0.0
        %1218 = vmatpush2.msra.mxu0 0.0
        %1219 = vmatprep.subr.mxu0 0.0
        %1220 = vmatpush2.msra.mxu0 0.0
        %1221 = vmatprep.subr.mxu0 0.0
        %1222 = vmatpush2.msra.mxu0 0.0
        %1223 = vmatprep.subr.mxu0 0.0
        %1224 = vmatpush2.msra.mxu0 0.0
        %1225 = vmatprep.subr.mxu0 0.0
        %1226 = vmatpush2.msra.mxu0 0.0
        %1227 = vmatprep.subr.mxu0 0.0
        %1228 = vmatpush2.msra.mxu0 0.0
        %1229 = vmatprep.subr.mxu0 0.0
        %1230 = vmatpush2.msra.mxu0 0.0
        %1231 = vmatprep.subr.mxu0 0.0
        %1232 = vmatpush2.msra.mxu0 0.0
        %1233 = vmatprep.mubr.f32.mxu0 0.0
        %1234 = vmatmul.mubr.f32.gmra.mxu0 %v1161
        %v1235 = vpop.f32.mrf.mxu0
        %v1236 = vadd.f32 %v1150, %v1235
        %v1237 = vpop.f32.mrf.mxu0
        %v1238 = vadd.f32 %v1150, %v1237
        %1239 = vmatprep.mubr.f32.mxu0 0.0
        %1240 = vmatmul.mubr.f32.gmra.mxu0 %v1164
        %v1241 = vpop.f32.mrf.mxu0
        %v1242 = vadd.f32 %v1154, %v1241
        %v1243 = vpop.f32.mrf.mxu0
        %v1244 = vadd.f32 %v1154, %v1243
        %1245 = vmatprep.mubr.f32.mxu0 0.0
        %1246 = vmatmul.mubr.f32.gmra.mxu0 %v1167
        %v1247 = vpop.f32.mrf.mxu0
        %v1248 = vadd.f32 %v1158, %v1247
        %v1249 = vpop.f32.mrf.mxu0
        %v1250 = vadd.f32 %v1158, %v1249
        %1251 = vdwg.mxu0
        %1252 = vmatprep.subr.mxu0 0.0
        %1253 = vmatpush1.msra.mxu0 0.0
        %1254 = vmatprep.subr.mxu0 0.0
        %1255 = vmatpush1.msra.mxu0 0.0
        %1256 = vmatprep.subr.mxu0 0.0
        %1257 = vmatpush1.msra.mxu0 0.0
        %1258 = vmatprep.subr.mxu0 0.0
        %1259 = vmatpush1.msra.mxu0 0.0
        %1260 = vmatprep.subr.mxu0 0.0
        %1261 = vmatpush1.msra.mxu0 0.0
        %1262 = vmatprep.subr.mxu0 0.0
        %1263 = vmatpush1.msra.mxu0 0.0
        %1264 = vmatprep.subr.mxu0 0.0
        %1265 = vmatpush1.msra.mxu0 0.0
        %1266 = vmatprep.subr.mxu0 0.0
        %1267 = vmatpush1.msra.mxu0 0.0
        %1268 = vmatprep.subr.mxu0 0.0
        %1269 = vmatpush1.msra.mxu0 0.0
        %1270 = vmatprep.subr.mxu0 0.0
        %1271 = vmatpush1.msra.mxu0 0.0
        %1272 = vmatprep.subr.mxu0 0.0
        %1273 = vmatpush1.msra.mxu0 0.0
        %1274 = vmatprep.subr.mxu0 0.0
        %1275 = vmatpush1.msra.mxu0 0.0
        %1276 = vmatprep.subr.mxu0 0.0
        %1277 = vmatpush1.msra.mxu0 0.0
        %1278 = vmatprep.subr.mxu0 0.0
        %1279 = vmatpush1.msra.mxu0 0.0
        %1280 = vmatprep.subr.mxu0 0.0
        %1281 = vmatpush1.msra.mxu0 0.0
        %1282 = vmatprep.subr.mxu0 %v1140
        %1283 = vmatpush1.msra.mxu0 %v1139
        %1284 = vmatprep.subr.mxu0 0.0
        %1285 = vmatpush2.msra.mxu0 0.0
        %1286 = vmatprep.subr.mxu0 0.0
        %1287 = vmatpush2.msra.mxu0 0.0
        %1288 = vmatprep.subr.mxu0 0.0
        %1289 = vmatpush2.msra.mxu0 0.0
        %1290 = vmatprep.subr.mxu0 0.0
        %1291 = vmatpush2.msra.mxu0 0.0
        %1292 = vmatprep.subr.mxu0 0.0
        %1293 = vmatpush2.msra.mxu0 0.0
        %1294 = vmatprep.subr.mxu0 0.0
        %1295 = vmatpush2.msra.mxu0 0.0
        %1296 = vmatprep.subr.mxu0 0.0
        %1297 = vmatpush2.msra.mxu0 0.0
        %1298 = vmatprep.subr.mxu0 0.0
        %1299 = vmatpush2.msra.mxu0 0.0
        %1300 = vmatprep.subr.mxu0 0.0
        %1301 = vmatpush2.msra.mxu0 0.0
        %1302 = vmatprep.subr.mxu0 0.0
        %1303 = vmatpush2.msra.mxu0 0.0
        %1304 = vmatprep.subr.mxu0 0.0
        %1305 = vmatpush2.msra.mxu0 0.0
        %1306 = vmatprep.subr.mxu0 0.0
        %1307 = vmatpush2.msra.mxu0 0.0
        %1308 = vmatprep.subr.mxu0 0.0
        %1309 = vmatpush2.msra.mxu0 0.0
        %1310 = vmatprep.subr.mxu0 0.0
        %1311 = vmatpush2.msra.mxu0 0.0
        %1312 = vmatprep.subr.mxu0 0.0
        %1313 = vmatpush2.msra.mxu0 0.0
        %1314 = vmatprep.subr.mxu0 0.0
        %1315 = vmatpush2.msra.mxu0 0.0
        %1316 = vmatprep.mubr.f32.mxu0 0.0
        %1317 = vmatmul.mubr.f32.gmra.mxu0 %v1161
        %v1318 = vpop.f32.mrf.mxu0
        %v1319 = vadd.f32 %v1150, %v1318
        %v1320 = vpop.f32.mrf.mxu0
        %v1321 = vadd.f32 %v1150, %v1320
        %1322 = vmatprep.mubr.f32.mxu0 0.0
        %1323 = vmatmul.mubr.f32.gmra.mxu0 %v1164
        %v1324 = vpop.f32.mrf.mxu0
        %v1325 = vadd.f32 %v1154, %v1324
        %v1326 = vpop.f32.mrf.mxu0
        %v1327 = vadd.f32 %v1154, %v1326
        %1328 = vmatprep.mubr.f32.mxu0 0.0
        %1329 = vmatmul.mubr.f32.gmra.mxu0 %v1167
        %v1330 = vpop.f32.mrf.mxu0
        %v1331 = vadd.f32 %v1158, %v1330
        %v1332 = vpop.f32.mrf.mxu0
        %v1333 = vadd.f32 %v1158, %v1332
        %1334 = vdwg.mxu0
        %1335 = vmatprep.subr.mxu0 0.0
        %1336 = vmatpush1.msra.mxu0 0.0
        %1337 = vmatprep.subr.mxu0 0.0
        %1338 = vmatpush1.msra.mxu0 0.0
        %1339 = vmatprep.subr.mxu0 0.0
        %1340 = vmatpush1.msra.mxu0 0.0
        %1341 = vmatprep.subr.mxu0 0.0
        %1342 = vmatpush1.msra.mxu0 0.0
        %1343 = vmatprep.subr.mxu0 0.0
        %1344 = vmatpush1.msra.mxu0 0.0
        %1345 = vmatprep.subr.mxu0 0.0
        %1346 = vmatpush1.msra.mxu0 0.0
        %1347 = vmatprep.subr.mxu0 0.0
        %1348 = vmatpush1.msra.mxu0 0.0
        %1349 = vmatprep.subr.mxu0 0.0
        %1350 = vmatpush1.msra.mxu0 0.0
        %1351 = vmatprep.subr.mxu0 0.0
        %1352 = vmatpush1.msra.mxu0 0.0
        %1353 = vmatprep.subr.mxu0 0.0
        %1354 = vmatpush1.msra.mxu0 0.0
        %1355 = vmatprep.subr.mxu0 0.0
        %1356 = vmatpush1.msra.mxu0 0.0
        %1357 = vmatprep.subr.mxu0 0.0
        %1358 = vmatpush1.msra.mxu0 0.0
        %1359 = vmatprep.subr.mxu0 0.0
        %1360 = vmatpush1.msra.mxu0 0.0
        %1361 = vmatprep.subr.mxu0 0.0
        %1362 = vmatpush1.msra.mxu0 0.0
        %1363 = vmatprep.subr.mxu0 0.0
        %1364 = vmatpush1.msra.mxu0 0.0
        %1365 = vmatprep.subr.mxu0 %v1142
        %1366 = vmatpush1.msra.mxu0 %v1141
        %1367 = vmatprep.subr.mxu0 0.0
        %1368 = vmatpush2.msra.mxu0 0.0
        %1369 = vmatprep.subr.mxu0 0.0
        %1370 = vmatpush2.msra.mxu0 0.0
        %1371 = vmatprep.subr.mxu0 0.0
        %1372 = vmatpush2.msra.mxu0 0.0
        %1373 = vmatprep.subr.mxu0 0.0
        %1374 = vmatpush2.msra.mxu0 0.0
        %1375 = vmatprep.subr.mxu0 0.0
        %1376 = vmatpush2.msra.mxu0 0.0
        %1377 = vmatprep.subr.mxu0 0.0
        %1378 = vmatpush2.msra.mxu0 0.0
        %1379 = vmatprep.subr.mxu0 0.0
        %1380 = vmatpush2.msra.mxu0 0.0
        %1381 = vmatprep.subr.mxu0 0.0
        %1382 = vmatpush2.msra.mxu0 0.0
        %1383 = vmatprep.subr.mxu0 0.0
        %1384 = vmatpush2.msra.mxu0 0.0
        %1385 = vmatprep.subr.mxu0 0.0
        %1386 = vmatpush2.msra.mxu0 0.0
        %1387 = vmatprep.subr.mxu0 0.0
        %1388 = vmatpush2.msra.mxu0 0.0
        %1389 = vmatprep.subr.mxu0 0.0
        %1390 = vmatpush2.msra.mxu0 0.0
        %1391 = vmatprep.subr.mxu0 0.0
        %1392 = vmatpush2.msra.mxu0 0.0
        %1393 = vmatprep.subr.mxu0 0.0
        %1394 = vmatpush2.msra.mxu0 0.0
        %1395 = vmatprep.subr.mxu0 0.0
        %1396 = vmatpush2.msra.mxu0 0.0
        %1397 = vmatprep.subr.mxu0 0.0
        %1398 = vmatpush2.msra.mxu0 0.0
        %1399 = vmatprep.mubr.f32.mxu0 0.0
        %1400 = vmatmul.mubr.f32.gmra.mxu0 %v1161
        %v1401 = vpop.f32.mrf.mxu0
        %v1402 = vadd.f32 %v1150, %v1401
        %v1403 = vpop.f32.mrf.mxu0
        %v1404 = vadd.f32 %v1150, %v1403
        %1405 = vmatprep.mubr.f32.mxu0 0.0
        %1406 = vmatmul.mubr.f32.gmra.mxu0 %v1164
        %v1407 = vpop.f32.mrf.mxu0
        %v1408 = vadd.f32 %v1154, %v1407
        %v1409 = vpop.f32.mrf.mxu0
        %v1410 = vadd.f32 %v1154, %v1409
        %1411 = vmatprep.mubr.f32.mxu0 0.0
        %1412 = vmatmul.mubr.f32.gmra.mxu0 %v1167
        %v1413 = vpop.f32.mrf.mxu0
        %v1414 = vadd.f32 %v1158, %v1413
        %v1415 = vpop.f32.mrf.mxu0
        %v1416 = vadd.f32 %v1158, %v1415
        %1417 = vdwg.mxu0
        %1418 = vmatprep.subr.mxu0 0.0
        %1419 = vmatpush1.msra.mxu0 0.0
        %1420 = vmatprep.subr.mxu0 0.0
        %1421 = vmatpush1.msra.mxu0 0.0
        %1422 = vmatprep.subr.mxu0 0.0
        %1423 = vmatpush1.msra.mxu0 0.0
        %1424 = vmatprep.subr.mxu0 0.0
        %1425 = vmatpush1.msra.mxu0 0.0
        %1426 = vmatprep.subr.mxu0 0.0
        %1427 = vmatpush1.msra.mxu0 0.0
        %1428 = vmatprep.subr.mxu0 0.0
        %1429 = vmatpush1.msra.mxu0 0.0
        %1430 = vmatprep.subr.mxu0 0.0
        %1431 = vmatpush1.msra.mxu0 0.0
        %1432 = vmatprep.subr.mxu0 0.0
        %1433 = vmatpush1.msra.mxu0 0.0
        %1434 = vmatprep.subr.mxu0 0.0
        %1435 = vmatpush1.msra.mxu0 0.0
        %1436 = vmatprep.subr.mxu0 0.0
        %1437 = vmatpush1.msra.mxu0 0.0
        %1438 = vmatprep.subr.mxu0 0.0
        %1439 = vmatpush1.msra.mxu0 0.0
        %1440 = vmatprep.subr.mxu0 0.0
        %1441 = vmatpush1.msra.mxu0 0.0
        %1442 = vmatprep.subr.mxu0 0.0
        %1443 = vmatpush1.msra.mxu0 0.0
        %1444 = vmatprep.subr.mxu0 0.0
        %1445 = vmatpush1.msra.mxu0 0.0
        %1446 = vmatprep.subr.mxu0 0.0
        %1447 = vmatpush1.msra.mxu0 0.0
        %1448 = vmatprep.subr.mxu0 %v1144
        %1449 = vmatpush1.msra.mxu0 %v1143
        %1450 = vmatprep.subr.mxu0 0.0
        %1451 = vmatpush2.msra.mxu0 0.0
        %1452 = vmatprep.subr.mxu0 0.0
        %1453 = vmatpush2.msra.mxu0 0.0
        %1454 = vmatprep.subr.mxu0 0.0
        %1455 = vmatpush2.msra.mxu0 0.0
        %1456 = vmatprep.subr.mxu0 0.0
        %1457 = vmatpush2.msra.mxu0 0.0
        %1458 = vmatprep.subr.mxu0 0.0
        %1459 = vmatpush2.msra.mxu0 0.0
        %1460 = vmatprep.subr.mxu0 0.0
        %1461 = vmatpush2.msra.mxu0 0.0
        %1462 = vmatprep.subr.mxu0 0.0
        %1463 = vmatpush2.msra.mxu0 0.0
        %1464 = vmatprep.subr.mxu0 0.0
        %1465 = vmatpush2.msra.mxu0 0.0
        %1466 = vmatprep.subr.mxu0 0.0
        %1467 = vmatpush2.msra.mxu0 0.0
        %1468 = vmatprep.subr.mxu0 0.0
        %1469 = vmatpush2.msra.mxu0 0.0
        %1470 = vmatprep.subr.mxu0 0.0
        %1471 = vmatpush2.msra.mxu0 0.0
        %1472 = vmatprep.subr.mxu0 0.0
        %1473 = vmatpush2.msra.mxu0 0.0
        %1474 = vmatprep.subr.mxu0 0.0
        %1475 = vmatpush2.msra.mxu0 0.0
        %1476 = vmatprep.subr.mxu0 0.0
        %1477 = vmatpush2.msra.mxu0 0.0
        %1478 = vmatprep.subr.mxu0 0.0
        %1479 = vmatpush2.msra.mxu0 0.0
        %1480 = vmatprep.subr.mxu0 0.0
        %1481 = vmatpush2.msra.mxu0 0.0
        %1482 = vmatprep.mubr.f32.mxu0 0.0
        %1483 = vmatmul.mubr.f32.gmra.mxu0 %v1161
        %v1484 = vpop.f32.mrf.mxu0
        %v1485 = vadd.f32 %v1150, %v1484
        %v1486 = vpop.f32.mrf.mxu0
        %v1487 = vadd.f32 %v1150, %v1486
        %1488 = vmatprep.mubr.f32.mxu0 0.0
        %1489 = vmatmul.mubr.f32.gmra.mxu0 %v1164
        %v1490 = vpop.f32.mrf.mxu0
        %v1491 = vadd.f32 %v1154, %v1490
        %v1492 = vpop.f32.mrf.mxu0
        %v1493 = vadd.f32 %v1154, %v1492
        %1494 = vmatprep.mubr.f32.mxu0 0.0
        %1495 = vmatmul.mubr.f32.gmra.mxu0 %v1167
        %v1496 = vpop.f32.mrf.mxu0
        %v1497 = vadd.f32 %v1158, %v1496
        %v1498 = vpop.f32.mrf.mxu0
        %v1499 = vadd.f32 %v1158, %v1498
        %1500 = vdwg.mxu0
        %v1501 = vmax.f32 %v1236, 0.0
        %v1502 = vmax.f32 %v1238, 0.0
        %v1503 = vmax.f32 %v1319, 0.0
        %v1504 = vmax.f32 %v1321, 0.0
        %v1505 = vmax.f32 %v1402, 0.0
        %v1506 = vmax.f32 %v1404, 0.0
        %v1507 = vmax.f32 %v1485, 0.0
        %v1508 = vmax.f32 %v1487, 0.0
        %v1509 = vmax.f32 %v1242, 0.0
        %v1510 = vmax.f32 %v1244, 0.0
        %v1511 = vmax.f32 %v1325, 0.0
        %v1512 = vmax.f32 %v1327, 0.0
        %v1513 = vmax.f32 %v1408, 0.0
        %v1514 = vmax.f32 %v1410, 0.0
        %v1515 = vmax.f32 %v1491, 0.0
        %v1516 = vmax.f32 %v1493, 0.0
        %v1517 = vmax.f32 %v1248, 0.0
        %v1518 = vmax.f32 %v1250, 0.0
        %v1519 = vmax.f32 %v1331, 0.0
        %v1520 = vmax.f32 %v1333, 0.0
        %v1521 = vmax.f32 %v1414, 0.0
        %v1522 = vmax.f32 %v1416, 0.0
        %v1523 = vmax.f32 %v1497, 0.0
        %v1524 = vmax.f32 %v1499, 0.0
        %v1525 = vld [vmem:[#allocation5 + $0x50] sm:$0xff]
        %1526 = vset.pattern.permute.xlu0 69
        %1527 = vperm.xlu0 %1526, %v178
        %v1528 = vpop.permute.xlu0 %1527
        %v1531 = vsel %vm809, %v1525, 0
        %1533 = vmatprep.subr.mxu0 0.0
        %1534 = vmatpush1.msra.mxu0 0.0
        %1535 = vmatprep.subr.mxu0 0.0
        %1536 = vmatpush1.msra.mxu0 0.0
        %1537 = vmatprep.subr.mxu0 0.0
        %1538 = vmatpush1.msra.mxu0 0.0
        %1539 = vmatprep.subr.mxu0 0.0
        %1540 = vmatpush1.msra.mxu0 0.0
        %1541 = vmatprep.subr.mxu0 0.0
        %1542 = vmatpush1.msra.mxu0 0.0
        %1543 = vmatprep.subr.mxu0 0.0
        %1544 = vmatpush1.msra.mxu0 0.0
        %1545 = vmatprep.subr.mxu0 0.0
        %1546 = vmatpush1.msra.mxu0 0.0
        %1547 = vmatprep.subr.mxu0 0.0
        %1548 = vmatpush1.msra.mxu0 0.0
        %1549 = vmatprep.subr.mxu0 0.0
        %1550 = vmatpush1.msra.mxu0 0.0
        %1551 = vmatprep.subr.mxu0 0.0
        %1552 = vmatpush1.msra.mxu0 0.0
        %1553 = vmatprep.subr.mxu0 0.0
        %1554 = vmatpush1.msra.mxu0 0.0
        %1555 = vmatprep.subr.mxu0 0.0
        %1556 = vmatpush1.msra.mxu0 0.0
        %1557 = vmatprep.subr.mxu0 0.0
        %1558 = vmatpush1.msra.mxu0 0.0
        %1559 = vmatprep.subr.mxu0 %v1518
        %1560 = vmatpush1.msra.mxu0 %v1517
        %1561 = vmatprep.subr.mxu0 %v1510
        %1562 = vmatpush1.msra.mxu0 %v1509
        %1563 = vmatprep.subr.mxu0 %v1502
        %1564 = vmatpush1.msra.mxu0 %v1501
        %1565 = vmatprep.subr.mxu0 0.0
        %1566 = vmatpush2.msra.mxu0 0.0
        %1567 = vmatprep.subr.mxu0 0.0
        %1568 = vmatpush2.msra.mxu0 0.0
        %1569 = vmatprep.subr.mxu0 0.0
        %1570 = vmatpush2.msra.mxu0 0.0
        %1571 = vmatprep.subr.mxu0 0.0
        %1572 = vmatpush2.msra.mxu0 0.0
        %1573 = vmatprep.subr.mxu0 0.0
        %1574 = vmatpush2.msra.mxu0 0.0
        %1575 = vmatprep.subr.mxu0 0.0
        %1576 = vmatpush2.msra.mxu0 0.0
        %1577 = vmatprep.subr.mxu0 0.0
        %1578 = vmatpush2.msra.mxu0 0.0
        %1579 = vmatprep.subr.mxu0 0.0
        %1580 = vmatpush2.msra.mxu0 0.0
        %1581 = vmatprep.subr.mxu0 0.0
        %1582 = vmatpush2.msra.mxu0 0.0
        %1583 = vmatprep.subr.mxu0 0.0
        %1584 = vmatpush2.msra.mxu0 0.0
        %1585 = vmatprep.subr.mxu0 0.0
        %1586 = vmatpush2.msra.mxu0 0.0
        %1587 = vmatprep.subr.mxu0 0.0
        %1588 = vmatpush2.msra.mxu0 0.0
        %1589 = vmatprep.subr.mxu0 0.0
        %1590 = vmatpush2.msra.mxu0 0.0
        %1591 = vmatprep.subr.mxu0 0.0
        %1592 = vmatpush2.msra.mxu0 0.0
        %1593 = vmatprep.subr.mxu0 0.0
        %1594 = vmatpush2.msra.mxu0 0.0
        %1595 = vmatprep.subr.mxu0 0.0
        %1596 = vmatpush2.msra.mxu0 0.0
        %1597 = vmatprep.mubr.f32.mxu0 0.0
        %1598 = vmatmul.mubr.f32.gmra.mxu0 %v1531
        %v1599 = vpop.f32.mrf.mxu0
        %v1600 = vadd.f32 %v1528, %v1599
        %v1601 = vpop.f32.mrf.mxu0
        %v1602 = vadd.f32 %v1528, %v1601
        %1603 = vdwg.mxu0
        %1604 = vmatprep.subr.mxu0 0.0
        %1605 = vmatpush1.msra.mxu0 0.0
        %1606 = vmatprep.subr.mxu0 0.0
        %1607 = vmatpush1.msra.mxu0 0.0
        %1608 = vmatprep.subr.mxu0 0.0
        %1609 = vmatpush1.msra.mxu0 0.0
        %1610 = vmatprep.subr.mxu0 0.0
        %1611 = vmatpush1.msra.mxu0 0.0
        %1612 = vmatprep.subr.mxu0 0.0
        %1613 = vmatpush1.msra.mxu0 0.0
        %1614 = vmatprep.subr.mxu0 0.0
        %1615 = vmatpush1.msra.mxu0 0.0
        %1616 = vmatprep.subr.mxu0 0.0
        %1617 = vmatpush1.msra.mxu0 0.0
        %1618 = vmatprep.subr.mxu0 0.0
        %1619 = vmatpush1.msra.mxu0 0.0
        %1620 = vmatprep.subr.mxu0 0.0
        %1621 = vmatpush1.msra.mxu0 0.0
        %1622 = vmatprep.subr.mxu0 0.0
        %1623 = vmatpush1.msra.mxu0 0.0
        %1624 = vmatprep.subr.mxu0 0.0
        %1625 = vmatpush1.msra.mxu0 0.0
        %1626 = vmatprep.subr.mxu0 0.0
        %1627 = vmatpush1.msra.mxu0 0.0
        %1628 = vmatprep.subr.mxu0 0.0
        %1629 = vmatpush1.msra.mxu0 0.0
        %1630 = vmatprep.subr.mxu0 %v1520
        %1631 = vmatpush1.msra.mxu0 %v1519
        %1632 = vmatprep.subr.mxu0 %v1512
        %1633 = vmatpush1.msra.mxu0 %v1511
        %1634 = vmatprep.subr.mxu0 %v1504
        %1635 = vmatpush1.msra.mxu0 %v1503
        %1636 = vmatprep.subr.mxu0 0.0
        %1637 = vmatpush2.msra.mxu0 0.0
        %1638 = vmatprep.subr.mxu0 0.0
        %1639 = vmatpush2.msra.mxu0 0.0
        %1640 = vmatprep.subr.mxu0 0.0
        %1641 = vmatpush2.msra.mxu0 0.0
        %1642 = vmatprep.subr.mxu0 0.0
        %1643 = vmatpush2.msra.mxu0 0.0
        %1644 = vmatprep.subr.mxu0 0.0
        %1645 = vmatpush2.msra.mxu0 0.0
        %1646 = vmatprep.subr.mxu0 0.0
        %1647 = vmatpush2.msra.mxu0 0.0
        %1648 = vmatprep.subr.mxu0 0.0
        %1649 = vmatpush2.msra.mxu0 0.0
        %1650 = vmatprep.subr.mxu0 0.0
        %1651 = vmatpush2.msra.mxu0 0.0
        %1652 = vmatprep.subr.mxu0 0.0
        %1653 = vmatpush2.msra.mxu0 0.0
        %1654 = vmatprep.subr.mxu0 0.0
        %1655 = vmatpush2.msra.mxu0 0.0
        %1656 = vmatprep.subr.mxu0 0.0
        %1657 = vmatpush2.msra.mxu0 0.0
        %1658 = vmatprep.subr.mxu0 0.0
        %1659 = vmatpush2.msra.mxu0 0.0
        %1660 = vmatprep.subr.mxu0 0.0
        %1661 = vmatpush2.msra.mxu0 0.0
        %1662 = vmatprep.subr.mxu0 0.0
        %1663 = vmatpush2.msra.mxu0 0.0
        %1664 = vmatprep.subr.mxu0 0.0
        %1665 = vmatpush2.msra.mxu0 0.0
        %1666 = vmatprep.subr.mxu0 0.0
        %1667 = vmatpush2.msra.mxu0 0.0
        %1668 = vmatprep.mubr.f32.mxu0 0.0
        %1669 = vmatmul.mubr.f32.gmra.mxu0 %v1531
        %v1670 = vpop.f32.mrf.mxu0
        %v1671 = vadd.f32 %v1528, %v1670
        %v1672 = vpop.f32.mrf.mxu0
        %v1673 = vadd.f32 %v1528, %v1672
        %1674 = vdwg.mxu0
        %1675 = vmatprep.subr.mxu0 0.0
        %1676 = vmatpush1.msra.mxu0 0.0
        %1677 = vmatprep.subr.mxu0 0.0
        %1678 = vmatpush1.msra.mxu0 0.0
        %1679 = vmatprep.subr.mxu0 0.0
        %1680 = vmatpush1.msra.mxu0 0.0
        %1681 = vmatprep.subr.mxu0 0.0
        %1682 = vmatpush1.msra.mxu0 0.0
        %1683 = vmatprep.subr.mxu0 0.0
        %1684 = vmatpush1.msra.mxu0 0.0
        %1685 = vmatprep.subr.mxu0 0.0
        %1686 = vmatpush1.msra.mxu0 0.0
        %1687 = vmatprep.subr.mxu0 0.0
        %1688 = vmatpush1.msra.mxu0 0.0
        %1689 = vmatprep.subr.mxu0 0.0
        %1690 = vmatpush1.msra.mxu0 0.0
        %1691 = vmatprep.subr.mxu0 0.0
        %1692 = vmatpush1.msra.mxu0 0.0
        %1693 = vmatprep.subr.mxu0 0.0
        %1694 = vmatpush1.msra.mxu0 0.0
        %1695 = vmatprep.subr.mxu0 0.0
        %1696 = vmatpush1.msra.mxu0 0.0
        %1697 = vmatprep.subr.mxu0 0.0
        %1698 = vmatpush1.msra.mxu0 0.0
        %1699 = vmatprep.subr.mxu0 0.0
        %1700 = vmatpush1.msra.mxu0 0.0
        %1701 = vmatprep.subr.mxu0 %v1522
        %1702 = vmatpush1.msra.mxu0 %v1521
        %1703 = vmatprep.subr.mxu0 %v1514
        %1704 = vmatpush1.msra.mxu0 %v1513
        %1705 = vmatprep.subr.mxu0 %v1506
        %1706 = vmatpush1.msra.mxu0 %v1505
        %1707 = vmatprep.subr.mxu0 0.0
        %1708 = vmatpush2.msra.mxu0 0.0
        %1709 = vmatprep.subr.mxu0 0.0
        %1710 = vmatpush2.msra.mxu0 0.0
        %1711 = vmatprep.subr.mxu0 0.0
        %1712 = vmatpush2.msra.mxu0 0.0
        %1713 = vmatprep.subr.mxu0 0.0
        %1714 = vmatpush2.msra.mxu0 0.0
        %1715 = vmatprep.subr.mxu0 0.0
        %1716 = vmatpush2.msra.mxu0 0.0
        %1717 = vmatprep.subr.mxu0 0.0
        %1718 = vmatpush2.msra.mxu0 0.0
        %1719 = vmatprep.subr.mxu0 0.0
        %1720 = vmatpush2.msra.mxu0 0.0
        %1721 = vmatprep.subr.mxu0 0.0
        %1722 = vmatpush2.msra.mxu0 0.0
        %1723 = vmatprep.subr.mxu0 0.0
        %1724 = vmatpush2.msra.mxu0 0.0
        %1725 = vmatprep.subr.mxu0 0.0
        %1726 = vmatpush2.msra.mxu0 0.0
        %1727 = vmatprep.subr.mxu0 0.0
        %1728 = vmatpush2.msra.mxu0 0.0
        %1729 = vmatprep.subr.mxu0 0.0
        %1730 = vmatpush2.msra.mxu0 0.0
        %1731 = vmatprep.subr.mxu0 0.0
        %1732 = vmatpush2.msra.mxu0 0.0
        %1733 = vmatprep.subr.mxu0 0.0
        %1734 = vmatpush2.msra.mxu0 0.0
        %1735 = vmatprep.subr.mxu0 0.0
        %1736 = vmatpush2.msra.mxu0 0.0
        %1737 = vmatprep.subr.mxu0 0.0
        %1738 = vmatpush2.msra.mxu0 0.0
        %1739 = vmatprep.mubr.f32.mxu0 0.0
        %1740 = vmatmul.mubr.f32.gmra.mxu0 %v1531
        %v1741 = vpop.f32.mrf.mxu0
        %v1742 = vadd.f32 %v1528, %v1741
        %v1743 = vpop.f32.mrf.mxu0
        %v1744 = vadd.f32 %v1528, %v1743
        %1745 = vdwg.mxu0
        %1746 = vmatprep.subr.mxu0 0.0
        %1747 = vmatpush1.msra.mxu0 0.0
        %1748 = vmatprep.subr.mxu0 0.0
        %1749 = vmatpush1.msra.mxu0 0.0
        %1750 = vmatprep.subr.mxu0 0.0
        %1751 = vmatpush1.msra.mxu0 0.0
        %1752 = vmatprep.subr.mxu0 0.0
        %1753 = vmatpush1.msra.mxu0 0.0
        %1754 = vmatprep.subr.mxu0 0.0
        %1755 = vmatpush1.msra.mxu0 0.0
        %1756 = vmatprep.subr.mxu0 0.0
        %1757 = vmatpush1.msra.mxu0 0.0
        %1758 = vmatprep.subr.mxu0 0.0
        %1759 = vmatpush1.msra.mxu0 0.0
        %1760 = vmatprep.subr.mxu0 0.0
        %1761 = vmatpush1.msra.mxu0 0.0
        %1762 = vmatprep.subr.mxu0 0.0
        %1763 = vmatpush1.msra.mxu0 0.0
        %1764 = vmatprep.subr.mxu0 0.0
        %1765 = vmatpush1.msra.mxu0 0.0
        %1766 = vmatprep.subr.mxu0 0.0
        %1767 = vmatpush1.msra.mxu0 0.0
        %1768 = vmatprep.subr.mxu0 0.0
        %1769 = vmatpush1.msra.mxu0 0.0
        %1770 = vmatprep.subr.mxu0 0.0
        %1771 = vmatpush1.msra.mxu0 0.0
        %1772 = vmatprep.subr.mxu0 %v1524
        %1773 = vmatpush1.msra.mxu0 %v1523
        %1774 = vmatprep.subr.mxu0 %v1516
        %1775 = vmatpush1.msra.mxu0 %v1515
        %1776 = vmatprep.subr.mxu0 %v1508
        %1777 = vmatpush1.msra.mxu0 %v1507
        %1778 = vmatprep.subr.mxu0 0.0
        %1779 = vmatpush2.msra.mxu0 0.0
        %1780 = vmatprep.subr.mxu0 0.0
        %1781 = vmatpush2.msra.mxu0 0.0
        %1782 = vmatprep.subr.mxu0 0.0
        %1783 = vmatpush2.msra.mxu0 0.0
        %1784 = vmatprep.subr.mxu0 0.0
        %1785 = vmatpush2.msra.mxu0 0.0
        %1786 = vmatprep.subr.mxu0 0.0
        %1787 = vmatpush2.msra.mxu0 0.0
        %1788 = vmatprep.subr.mxu0 0.0
        %1789 = vmatpush2.msra.mxu0 0.0
        %1790 = vmatprep.subr.mxu0 0.0
        %1791 = vmatpush2.msra.mxu0 0.0
        %1792 = vmatprep.subr.mxu0 0.0
        %1793 = vmatpush2.msra.mxu0 0.0
        %1794 = vmatprep.subr.mxu0 0.0
        %1795 = vmatpush2.msra.mxu0 0.0
        %1796 = vmatprep.subr.mxu0 0.0
        %1797 = vmatpush2.msra.mxu0 0.0
        %1798 = vmatprep.subr.mxu0 0.0
        %1799 = vmatpush2.msra.mxu0 0.0
        %1800 = vmatprep.subr.mxu0 0.0
        %1801 = vmatpush2.msra.mxu0 0.0
        %1802 = vmatprep.subr.mxu0 0.0
        %1803 = vmatpush2.msra.mxu0 0.0
        %1804 = vmatprep.subr.mxu0 0.0
        %1805 = vmatpush2.msra.mxu0 0.0
        %1806 = vmatprep.subr.mxu0 0.0
        %1807 = vmatpush2.msra.mxu0 0.0
        %1808 = vmatprep.subr.mxu0 0.0
        %1809 = vmatpush2.msra.mxu0 0.0
        %1810 = vmatprep.mubr.f32.mxu0 0.0
        %1811 = vmatmul.mubr.f32.gmra.mxu0 %v1531
        %v1812 = vpop.f32.mrf.mxu0
        %v1813 = vadd.f32 %v1528, %v1812
        %v1814 = vpop.f32.mrf.mxu0
        %v1815 = vadd.f32 %v1528, %v1814
        %1816 = vdwg.mxu0
        %1817 = vst [vmem:[%s174] sm:$0xff] %v1137
        %1818 = vst [vmem:[%s174 + $0x8] sm:$0xff] %v1138
        %1819 = vst [vmem:[%s174 + $0x10] sm:$0xff] %v1139
        %1820 = vst [vmem:[%s174 + $0x18] sm:$0xff] %v1140
        %1821 = vst [vmem:[%s174 + $0x20] sm:$0xff] %v1141
        %1822 = vst [vmem:[%s174 + $0x28] sm:$0xff] %v1142
        %1823 = vst [vmem:[%s174 + $0x30] sm:$0xff] %v1143
        %1824 = vst [vmem:[%s174 + $0x38] sm:$0xff] %v1144
        %1825 = vst [vmem:[%s174 + $0x40] sm:$0xff] %v1600
        %1826 = vst [vmem:[%s174 + $0x48] sm:$0xff] %v1602
        %1827 = vst [vmem:[%s174 + $0x50] sm:$0xff] %v1671
        %1828 = vst [vmem:[%s174 + $0x58] sm:$0xff] %v1673
        %1829 = vst [vmem:[%s174 + $0x60] sm:$0xff] %v1742
        %1830 = vst [vmem:[%s174 + $0x68] sm:$0xff] %v1744
        %1831 = vst [vmem:[%s174 + $0x70] sm:$0xff] %v1813
        %1832 = vst [vmem:[%s174 + $0x78] sm:$0xff] %v1815
        %s1833 = sand.u32 %s75, 1
        %s1834 = scalar_lea.sflag [#allocation4], %s1833
        %s1835 = sand.u32 %s75, 1
        %s1836 = smul.addr %s1835, 128
        %s1837 = scalar_lea.vmem [#allocation7], %s1836
        // Predicated region
        $region37: #{tpu_custom_call.1} parent=27 // pred_check
          %p1838 = pneg %p85
        $region38: #{tpu_custom_call.1} parent=27 // pred_check_branch
          %1840 = sbr.rel (%p1838) target = $region40
        $region39: #{tpu_custom_call.1} parent=27 // pred_region
          %s1841 = smul.u32 8, %s20
          %s1843 = ssub.s32 2048, 2048
          %1844 = vsyncadd %s1834, %s1843
          %s1845 = smul.addr %s1841, 128
          %s1846 = scalar_lea.hbm %s2, %s1845
          %s1847 = sshll.u32 %s1837, 4
          %s1848 = int_to_ptr.vmem [resolvable:$true] %s1847
          %1853 = dma.vmem_to_hbm [thread:$0]  %s1848, 2048, %s1846, %s1834, 1024, 2048, 64
        $region40: #{tpu_custom_call.1} parent=27 // pred_fallthru
          _
      $region28: #{tpu_custom_call.1} parent=5 // pred_fallthru
        _
      %p1854 = scmp.le.s32.totalorder 2, %s15
      // Predicated region
      $region41: #{tpu_custom_call.1} parent=5 // pred_check
        %p1855 = pneg %p1854
      $region42: #{tpu_custom_call.1} parent=5 // pred_check_branch
        %1857 = sbr.rel (%p1855) target = $region44
      $region43: #{tpu_custom_call.1} parent=5 // pred_region
        %s1858 = ssub.s32 %s15, 2
        // Predicated region
        $region45: #{tpu_custom_call.1} parent=43 // pred_check
          %p1859 = pneg %p91
        $region46: #{tpu_custom_call.1} parent=43 // pred_check_branch
          %1861 = sbr.rel (%p1859) target = $region48
        $region47: #{tpu_custom_call.1} parent=43 // pred_region
          %s1862 = sand.u32 %s76, 1
          %s1863 = scalar_lea.sflag [#allocation4], %s1862
          %s1864 = sand.u32 %s76, 1
          %s1865 = smul.addr %s1864, 128
          %s1866 = scalar_lea.vmem [#allocation7], %s1865
          %1867 = dma.done %s1863, 2048
        $region48: #{tpu_custom_call.1} parent=43 // pred_fallthru
          _
      $region44: #{tpu_custom_call.1} parent=5 // pred_fallthru
        _
    $region6: #{tpu_custom_call.1} parent=1 // loop_footer
      %s19 = sadd.s32 1, %s15
    $region7: #{tpu_custom_call.1} parent=1 // loop_footer_branch
      %14 = sbr.rel target = $region3
    $region8: #{tpu_custom_call.1} parent=1 // loop_exit
      _
    %1868 = vsyncpa [#allocation3], 1
    %s1869 = scalar_lea.sflag [#allocation3], 1
    %1870 = vsyncpa %s1869, 1
    %1871 = vsyncpa [#allocation6], 1
    %1872 = vsyncpa [#allocation4], 1
    %s1873 = scalar_lea.sflag [#allocation4], 1
    %1874 = vsyncpa %s1873, 1

</llo_original>
